<compile_context>
chip_gen: v6e
topology: v6e:2x2x1
jax: 0.10.0
libtpu: 0.0.40
codegen_flags: <defaults>
</compile_context>

<pallas_src>
import math
import jax
import jax.numpy as jnp
from jax import lax
from jax.experimental import pallas as pl
from jax.experimental.pallas import tpu as pltpu


# --------------------------------------------------------------------------- #
# Kernel
# --------------------------------------------------------------------------- #
def resblock_kernel(x_ref, w_ref, vec_ref, o_ref):
    # x_ref:   (Nb, H, W*C)     f32 lane-dense input block
    # w_ref:   (2, 3*W*C, W*C)  bf16 banded conv weights (conv1, conv2); the three
    #                           vertical taps are stacked along K
    # vec_ref: (3, W*C)         f32 [bias1; bias2; prelu_alpha], tiled across W
    # o_ref:   (Nb, H, W*C)     output block
    Nb, H, WC = x_ref.shape
    R = Nb * H

    # (Nb, H, WC) -> (Nb*H, WC): H is a multiple of 8, so merging the leading dims
    # keeps the (8, 128) tiling and is layout-free.
    x = x_ref[...].reshape(R, WC).astype(jnp.float32)

    vec = vec_ref[...].astype(jnp.float32)
    b1 = vec[0:1, :]
    b2 = vec[1:2, :]
    alpha = vec[2:3, :]

    # Hoisted 0/1 boundary masks == the conv's zero padding along H.  The cyclic
    # sublane rolls wrap rows across image boundaries; exactly those rows are zeroed.
    h_idx = lax.broadcasted_iota(jnp.int32, (R, WC), 0) % H
    top_mask = (h_idx != 0).astype(jnp.float32)        # kills wrapped row at h == 0
    bot_mask = (h_idx != H - 1).astype(jnp.float32)    # kills wrapped row at h == H-1

    def conv3x3(v, w_bf16, bias):
        # Shifted row views via XLU sublane rolls; W-padding lives inside the banded
        # weights; the 3 vertical taps are concatenated along K -> one MXU matmul
        # with in-MXU accumulation.
        v_dn = pltpu.roll(v, shift=1, axis=0) * top_mask        # v[h-1]
        v_up = pltpu.roll(v, shift=R - 1, axis=0) * bot_mask    # v[h+1]
        lhs = jnp.concatenate([v_dn, v, v_up], axis=1).astype(jnp.bfloat16)
        return jnp.dot(lhs, w_bf16, preferred_element_type=jnp.float32) + bias

    y1 = conv3x3(x, w_ref[0], b1)
    act1 = jnp.where(y1 >= 0.0, y1, alpha * y1)                 # PReLU (per-channel slope)
    y2 = conv3x3(act1, w_ref[1], b2)

    # Residual add in f32: identity is the whole aligned lane-dense block.
    o_ref[...] = (x + y2).reshape(Nb, H, WC).astype(o_ref.dtype)


# --------------------------------------------------------------------------- #
# Wrapper helpers
# --------------------------------------------------------------------------- #
def _banded_weights(w_oihw, W):
    """OIHW (C, C, 3, 3) -> (3*W*C, W*C) banded matrix, vertical taps stacked along K.

    Rows [ky*W*C:(ky+1)*W*C] hold
      M[ky][w_src*C + ci, w_dst*C + co] = w[co, ci, ky, kx] with kx = w_src - w_dst + 1,
    zero outside |w_src - w_dst| <= 1.  Missing bands at w_dst = 0 / W-1 encode the
    zero padding along W, so no explicit W-padding is needed in the kernel.
    """
    Cout, Cin, KH, KW = w_oihw.shape
    w_hwio = jnp.transpose(w_oihw, (2, 3, 1, 0)).astype(jnp.float32)    # (3, 3, Cin, Cout)
    mats = []
    for ky in range(KH):
        m = jnp.zeros((W * Cin, W * Cout), jnp.float32)
        for kx in range(KW):
            band = jnp.eye(W, W, k=1 - kx, dtype=jnp.float32)           # w_dst = w_src + 1 - kx
            m = m + jnp.einsum('sw,io->siwo', band, w_hwio[ky, kx]).reshape(W * Cin, W * Cout)
        mats.append(m)
    return jnp.concatenate(mats, axis=0)                                # (3*W*Cin, W*Cout)


def _tpu_chip_params():
    """(physical VMEM bytes, TensorCores per chip) with conservative fallbacks."""
    vmem_cap = 128 << 20
    cores = 1
    try:
        info = pltpu.get_tpu_info()
        cap = getattr(info, "vmem_capacity_bytes", None)
        if isinstance(cap, int) and cap > 0:
            vmem_cap = cap
        for attr in ("num_tensorcores", "tensorcores_per_chip", "num_cores", "core_count"):
            v = getattr(info, attr, None)
            if isinstance(v, int) and v > 0:
                cores = v
                break
    except Exception:
        pass
    try:
        if "7" in jax.devices()[0].device_kind.lower():   # v7x family
            cores = max(cores, 2)
    except Exception:
        pass
    if vmem_cap <= (64 << 20):                            # 64 MiB physical VMEM => v7x
        cores = max(cores, 2)
    return vmem_cap, cores


def _select_nb(N, H, WC, block_budget, weight_bytes, min_steps, m_cap=2048):
    """Largest divisor of N whose per-step VMEM footprint fits the budget.

    Per merged row (WC lanes): double-buffered f32 in+out blocks (4x WC*4) plus
    in-kernel intermediates (masks, shifted views, bf16 (R,3*WC) LHS, activations)
    ~ 9x WC*4  ->  13 * WC * 4 bytes, counted honestly.
    """
    per_row = 13 * WC * 4
    best = 1
    for cand in range(N, 0, -1):
        if N % cand:
            continue
        steps = N // cand
        if steps < min_steps and cand > 1:
            continue                        # keep >= min_steps grid steps (megacore)
        if cand * H > m_cap and cand > 1:
            continue                        # no MXU benefit beyond ~2K rows per step
        if cand * H * per_row + weight_bytes <= block_budget:
            best = cand
            break
    return best


# --------------------------------------------------------------------------- #
# Public entry point
# --------------------------------------------------------------------------- #
def residual_block_nobn(x_nchw, w1, b1, alpha, w2, b2):
    """x_nchw: (N, C, H, W); w*: (C, C, 3, 3) PyTorch OIHW; b*, alpha: (C,)."""
    N, C, H, W = x_nchw.shape
    WC = W * C
    assert H % 8 == 0, "H must be a multiple of 8 (sublane tiling of the merged Nb*H axis)"

    # NCHW -> NHWC -> lane-dense (N, H, W*C): channels map to lanes.
    x = jnp.transpose(x_nchw, (0, 2, 3, 1)).reshape(N, H, WC)

    # bf16 banded weights (MXU path) and packed f32 bias/alpha vectors.
    w_packed = jnp.stack([_banded_weights(w1, W), _banded_weights(w2, W)], axis=0)
    w_packed = w_packed.astype(jnp.bfloat16)                            # (2, 3*WC, WC)
    vec = jnp.stack([jnp.tile(b1.astype(jnp.float32), W),
                     jnp.tile(b2.astype(jnp.float32), W),
                     jnp.tile(alpha.astype(jnp.float32), W)], axis=0)   # (3, WC)

    # Per-generation VMEM budget and TensorCore count.
    vmem_cap, cores = _tpu_chip_params()
    block_budget = (40 << 20) if vmem_cap <= (64 << 20) else (80 << 20)
    weight_bytes = 2 * (w_packed.size * 2 + 8 * WC * 4)   # worst case: double-buffered
    min_steps = 2 if cores >= 2 else 1
    Nb = _select_nb(N, H, WC, block_budget, weight_bytes, min_steps)

    vmem_limit = 13 * Nb * H * WC * 4 + weight_bytes + (8 << 20)
    vmem_limit = int(min(max(vmem_limit, 32 << 20), vmem_cap - (16 << 20)))

    def _call(single_buffer_invariants):
        inv = dict(pipeline_mode=pl.Buffered(1)) if single_buffer_invariants else {}
        fn = pl.pallas_call(
            resblock_kernel,
            out_shape=jax.ShapeDtypeStruct((N, H, WC), x.dtype),
            grid_spec=pltpu.PrefetchScalarGridSpec(
                num_scalar_prefetch=0,
                grid=(N // Nb,),
                in_specs=[
                    pl.BlockSpec((Nb, H, WC), lambda n: (n, 0, 0)),
                    pl.BlockSpec((2, 3 * WC, WC), lambda n: (0, 0, 0), **inv),
                    pl.BlockSpec((3, WC), lambda n: (0, 0), **inv),
                ],
                out_specs=pl.BlockSpec((Nb, H, WC), lambda n: (n, 0, 0)),
            ),
            compiler_params=pltpu.CompilerParams(
                dimension_semantics=("parallel",),        # no cross-step state -> megacore
                vmem_limit_bytes=vmem_limit),
        )
        return fn(x, w_packed, vec)

    try:
        out = jax.block_until_ready(_call(True))
    except Exception:
        # Fallback: default (double) buffering of the grid-invariant inputs.
        out = jax.block_until_ready(_call(False))

    return jnp.transpose(out.reshape(N, H, W, C), (0, 3, 1, 2))         # back to NCHW


def reference_forward(x_nchw, w1, b1, alpha, w2, b2):
    """Pure-JAX reference matching the PyTorch forward semantics."""
    dn = ('NCHW', 'OIHW', 'NCHW')
    y = lax.conv_general_dilated(x_nchw, w1, (1, 1), 'SAME', dimension_numbers=dn)
    y = y + b1[None, :, None, None]
    y = jnp.where(y >= 0, y, alpha[None, :, None, None] * y)            # PReLU
    y = lax.conv_general_dilated(y, w2, (1, 1), 'SAME', dimension_numbers=dn)
    y = y + b2[None, :, None, None]
    return x_nchw + y


if __name__ == "__main__":
    nf, N, H, W = 8, 8, 16, 16          # W * nf = 128 -> exactly one lane-dense vreg row
    key = jax.random.PRNGKey(0)
    kx, kw1, kw2 = jax.random.split(key, 3)

    # Deterministic init mirroring initialize_weights(kaiming) * 0.1, zero bias,
    # PReLU slope = 0.25 (nn.PReLU default).
    fan_in = nf * 3 * 3
    w1 = 0.1 * jax.random.normal(kw1, (nf, nf, 3, 3), jnp.float32) * math.sqrt(2.0 / fan_in)
    w2 = 0.1 * jax.random.normal(kw2, (nf, nf, 3, 3), jnp.float32) * math.sqrt(2.0 / fan_in)
    b1 = jnp.zeros((nf,), jnp.float32)
    b2 = jnp.zeros((nf,), jnp.float32)
    alpha = jnp.full((nf,), 0.25, jnp.float32)

    x = jax.random.normal(kx, (N, nf, H, W), jnp.float32)

    out = jax.block_until_ready(residual_block_nobn(x, w1, b1, alpha, w2, b2))
    ref = reference_forward(x, w1, b1, alpha, w2, b2)
    assert out.shape == ref.shape == (N, nf, H, W)
    err = jnp.max(jnp.abs(out - ref))
    # bf16 MXU path (f32 accumulation, exact f32 residual) -> slightly looser tolerance.
    assert jnp.allclose(out, ref, atol=5e-3, rtol=5e-3), f"max abs diff {err}"

    print("KERNEL_OK")
</pallas_src>

<mosaic_0001>
module attributes {stable_mosaic.version = 11 : i64} {
  func.func @resblock_kernel(%arg0: i32, %arg1: memref<8x16x128xf32, #tpu.memory_space<vmem>>, %arg2: memref<2x384x128xbf16, #tpu.memory_space<vmem>>, %arg3: memref<3x128xf32, #tpu.memory_space<vmem>>, %arg4: memref<8x16x128xf32, #tpu.memory_space<vmem>>) attributes {dimension_semantics = [#tpu.dimension_semantics<parallel>], iteration_bounds = array<i64: 1>, scalar_prefetch = 0 : i64, scratch_operands = 0 : i64, tpu.core_type = #tpu.core_type<tc>, window_params = [{transform_indices = @transform_0, window_bounds = array<i64: 8, 16, 128>}, {pipeline_mode = #tpu.pipeline_mode<synchronous>, transform_indices = @transform_1, window_bounds = array<i64: 2, 384, 128>}, {pipeline_mode = #tpu.pipeline_mode<synchronous>, transform_indices = @transform_2, window_bounds = array<i64: 3, 128>}, {transform_indices = @transform_3, window_bounds = array<i64: 8, 16, 128>}]} {
    %c0 = arith.constant 0 : index
    %c0_0 = arith.constant 0 : index
    %c0_1 = arith.constant 0 : index
    %0 = vector.load %arg1[%c0, %c0_0, %c0_1] : memref<8x16x128xf32, #tpu.memory_space<vmem>>, vector<8x16x128xf32>
    %1 = vector.shape_cast %0 : vector<8x16x128xf32> to vector<128x128xf32>
    %c0_2 = arith.constant 0 : index
    %c0_3 = arith.constant 0 : index
    %2 = vector.load %arg3[%c0_2, %c0_3] : memref<3x128xf32, #tpu.memory_space<vmem>>, vector<3x128xf32>
    %3 = vector.extract_strided_slice %2 {offsets = [0, 0], sizes = [1, 128], strides = [1, 1]} : vector<3x128xf32> to vector<1x128xf32>
    %4 = vector.extract_strided_slice %2 {offsets = [1, 0], sizes = [1, 128], strides = [1, 1]} : vector<3x128xf32> to vector<1x128xf32>
    %5 = vector.extract_strided_slice %2 {offsets = [2, 0], sizes = [1, 128], strides = [1, 1]} : vector<3x128xf32> to vector<1x128xf32>
    %6 = tpu.iota {dimensions = array<i32: 0>} : vector<128x128xi32>
    %c16_i32 = arith.constant 16 : i32
    %c0_i32 = arith.constant 0 : i32
    %7 = arith.cmpi eq, %c16_i32, %c0_i32 : i32
    %c1_i32 = arith.constant 1 : i32
    %8 = arith.select %7, %c1_i32, %c16_i32 : i32
    %9 = vector.broadcast %8 : i32 to vector<128x128xi32>
    %10 = arith.remsi %6, %9 : vector<128x128xi32>
    %c0_i32_4 = arith.constant 0 : i32
    %11 = vector.broadcast %c0_i32_4 : i32 to vector<128x128xi32>
    %12 = arith.cmpi ne, %10, %11 : vector<128x128xi32>
    %c0_i32_5 = arith.constant 0 : i32
    %13 = vector.broadcast %c0_i32_5 : i32 to vector<128x128xi32>
    %14 = arith.cmpi slt, %10, %13 : vector<128x128xi32>
    %c0_i32_6 = arith.constant 0 : i32
    %15 = arith.cmpi slt, %8, %c0_i32_6 : i32
    %16 = vector.broadcast %15 : i1 to vector<128x128xi1>
    %17 = vector.broadcast %16 : vector<128x128xi1> to vector<128x128xi1>
    %18 = arith.xori %14, %17 : vector<128x128xi1>
    %19 = arith.andi %18, %12 : vector<128x128xi1>
    %20 = vector.broadcast %8 : i32 to vector<128x128xi32>
    %21 = arith.addi %10, %20 : vector<128x128xi32>
    %22 = arith.select %19, %21, %10 : vector<128x128xi1>, vector<128x128xi32>
    %c0_i32_7 = arith.constant 0 : i32
    %23 = vector.broadcast %c0_i32_7 : i32 to vector<128x128xi32>
    %24 = arith.cmpi ne, %22, %23 : vector<128x128xi32>
    %25 = arith.extui %24 : vector<128x128xi1> to vector<128x128xi32>
    %26 = arith.sitofp %25 : vector<128x128xi32> to vector<128x128xf32>
    %c15_i32 = arith.constant 15 : i32
    %27 = vector.broadcast %c15_i32 : i32 to vector<128x128xi32>
    %28 = arith.cmpi ne, %22, %27 : vector<128x128xi32>
    %29 = arith.extui %28 : vector<128x128xi1> to vector<128x128xi32>
    %30 = arith.sitofp %29 : vector<128x128xi32> to vector<128x128xf32>
    %c0_8 = arith.constant 0 : index
    %c0_9 = arith.constant 0 : index
    %c0_10 = arith.constant 0 : index
    %31 = vector.load %arg2[%c0_8, %c0_9, %c0_10] : memref<2x384x128xbf16, #tpu.memory_space<vmem>>, vector<1x384x128xbf16>
    %32 = vector.shape_cast %31 : vector<1x384x128xbf16> to vector<384x128xbf16>
    %c1_i32_11 = arith.constant 1 : i32
    %33 = tpu.dynamic_rotate %1 by %c1_i32_11 dim 0 : vector<128x128xf32>, i32 -> vector<128x128xf32>
    %34 = arith.mulf %33, %26 : vector<128x128xf32>
    %c127_i32 = arith.constant 127 : i32
    %35 = tpu.dynamic_rotate %1 by %c127_i32 dim 0 : vector<128x128xf32>, i32 -> vector<128x128xf32>
    %36 = arith.mulf %35, %30 : vector<128x128xf32>
    %37 = tpu.concatenate %34, %1, %36 in 1 : vector<128x128xf32>, vector<128x128xf32>, vector<128x128xf32> -> vector<128x384xf32>
    %38 = arith.truncf %37 : vector<128x384xf32> to vector<128x384xbf16>
    %cst = arith.constant dense<0.000000e+00> : vector<128x128xf32>
    %39 = tpu.matmul %38, %32, %cst {dimension_numbers = #tpu.dot_dimension_numbers<[1], [0], [0], [1], [0, 0, 1, 1], [], []>} : vector<128x384xbf16>, vector<384x128xbf16>, vector<128x128xf32> -> vector<128x128xf32>
    %40 = vector.broadcast %3 : vector<1x128xf32> to vector<128x128xf32>
    %41 = arith.addf %39, %40 : vector<128x128xf32>
    %cst_12 = arith.constant 0.000000e+00 : f32
    %42 = vector.broadcast %cst_12 : f32 to vector<128x128xf32>
    %43 = arith.cmpf oge, %41, %42 : vector<128x128xf32>
    %44 = vector.broadcast %5 : vector<1x128xf32> to vector<128x128xf32>
    %45 = arith.mulf %44, %41 : vector<128x128xf32>
    %46 = arith.select %43, %41, %45 : vector<128x128xi1>, vector<128x128xf32>
    %c1 = arith.constant 1 : index
    %c0_13 = arith.constant 0 : index
    %c0_14 = arith.constant 0 : index
    %47 = vector.load %arg2[%c1, %c0_13, %c0_14] : memref<2x384x128xbf16, #tpu.memory_space<vmem>>, vector<1x384x128xbf16>
    %48 = vector.shape_cast %47 : vector<1x384x128xbf16> to vector<384x128xbf16>
    %c1_i32_15 = arith.constant 1 : i32
    %49 = tpu.dynamic_rotate %46 by %c1_i32_15 dim 0 : vector<128x128xf32>, i32 -> vector<128x128xf32>
    %50 = arith.mulf %49, %26 : vector<128x128xf32>
    %c127_i32_16 = arith.constant 127 : i32
    %51 = tpu.dynamic_rotate %46 by %c127_i32_16 dim 0 : vector<128x128xf32>, i32 -> vector<128x128xf32>
    %52 = arith.mulf %51, %30 : vector<128x128xf32>
    %53 = tpu.concatenate %50, %46, %52 in 1 : vector<128x128xf32>, vector<128x128xf32>, vector<128x128xf32> -> vector<128x384xf32>
    %54 = arith.truncf %53 : vector<128x384xf32> to vector<128x384xbf16>
    %cst_17 = arith.constant dense<0.000000e+00> : vector<128x128xf32>
    %55 = tpu.matmul %54, %48, %cst_17 {dimension_numbers = #tpu.dot_dimension_numbers<[1], [0], [0], [1], [0, 0, 1, 1], [], []>} : vector<128x384xbf16>, vector<384x128xbf16>, vector<128x128xf32> -> vector<128x128xf32>
    %56 = vector.broadcast %4 : vector<1x128xf32> to vector<128x128xf32>
    %57 = arith.addf %55, %56 : vector<128x128xf32>
    %58 = arith.addf %1, %57 : vector<128x128xf32>
    %59 = vector.shape_cast %58 : vector<128x128xf32> to vector<8x16x128xf32>
    %c0_18 = arith.constant 0 : index
    %c0_19 = arith.constant 0 : index
    %c0_20 = arith.constant 0 : index
    %60 = vector.load %arg4[%c0_18, %c0_19, %c0_20] : memref<8x16x128xf32, #tpu.memory_space<vmem>>, vector<8x16x128xf32>
    tpu.vector_store %arg4[%c0_18, %c0_19, %c0_20], %59 {strides = array<i32>} : memref<8x16x128xf32, #tpu.memory_space<vmem>>, vector<8x16x128xf32>,
    return
  }
  func.func @transform_0(%arg0: i32) -> (i32, i32, i32) {
    %c0_i32 = arith.constant 0 : i32
    %c0_i32_0 = arith.constant 0 : i32
    %c0_i32_1 = arith.constant 0 : i32
    return %arg0, %c0_i32, %c0_i32_0 : i32, i32, i32
  }
  func.func @transform_1(%arg0: i32) -> (i32, i32, i32) {
    %c0_i32 = arith.constant 0 : i32
    %c0_i32_0 = arith.constant 0 : i32
    %c0_i32_1 = arith.constant 0 : i32
    %c0_i32_2 = arith.constant 0 : i32
    return %c0_i32, %c0_i32_0, %c0_i32_1 : i32, i32, i32
  }
  func.func @transform_2(%arg0: i32) -> (i32, i32) {
    %c0_i32 = arith.constant 0 : i32
    %c0_i32_0 = arith.constant 0 : i32
    %c0_i32_1 = arith.constant 0 : i32
    return %c0_i32, %c0_i32_0 : i32, i32
  }
  func.func @transform_3(%arg0: i32) -> (i32, i32, i32) {
    %c0_i32 = arith.constant 0 : i32
    %c0_i32_0 = arith.constant 0 : i32
    %c0_i32_1 = arith.constant 0 : i32
    return %arg0, %c0_i32, %c0_i32_0 : i32, i32, i32
  }
}

module attributes {stable_mosaic.version = 11 : i64} {
  func.func @resblock_kernel(%arg0: i32, %arg1: memref<8x16x128xf32, #tpu.memory_space<vmem>>, %arg2: memref<2x384x128xbf16, #tpu.memory_space<vmem>>, %arg3: memref<3x128xf32, #tpu.memory_space<vmem>>, %arg4: memref<8x16x128xf32, #tpu.memory_space<vmem>>) attributes {dimension_semantics = [#tpu.dimension_semantics<parallel>], iteration_bounds = array<i64: 1>, scalar_prefetch = 0 : i64, scratch_operands = 0 : i64, tpu.core_type = #tpu.core_type<tc>, window_params = [{transform_indices = @transform_0, window_bounds = array<i64: 8, 16, 128>}, {pipeline_mode = #tpu.pipeline_mode<synchronous>, transform_indices = @transform_1, window_bounds = array<i64: 2, 384, 128>}, {pipeline_mode = #tpu.pipeline_mode<synchronous>, transform_indices = @transform_2, window_bounds = array<i64: 3, 128>}, {transform_indices = @transform_3, window_bounds = array<i64: 8, 16, 128>}]} {
    %c0 = arith.constant 0 : index
    %c0_0 = arith.constant 0 : index
    %c0_1 = arith.constant 0 : index
    %0 = vector.load %arg1[%c0, %c0_0, %c0_1] : memref<8x16x128xf32, #tpu.memory_space<vmem>>, vector<8x16x128xf32>
    %1 = vector.shape_cast %0 : vector<8x16x128xf32> to vector<128x128xf32>
    %c0_2 = arith.constant 0 : index
    %c0_3 = arith.constant 0 : index
    %2 = vector.load %arg3[%c0_2, %c0_3] : memref<3x128xf32, #tpu.memory_space<vmem>>, vector<3x128xf32>
    %3 = vector.extract_strided_slice %2 {offsets = [0, 0], sizes = [1, 128], strides = [1, 1]} : vector<3x128xf32> to vector<1x128xf32>
    %4 = vector.extract_strided_slice %2 {offsets = [1, 0], sizes = [1, 128], strides = [1, 1]} : vector<3x128xf32> to vector<1x128xf32>
    %5 = vector.extract_strided_slice %2 {offsets = [2, 0], sizes = [1, 128], strides = [1, 1]} : vector<3x128xf32> to vector<1x128xf32>
    %6 = tpu.iota {dimensions = array<i32: 0>} : vector<128x128xi32>
    %c16_i32 = arith.constant 16 : i32
    %c0_i32 = arith.constant 0 : i32
    %7 = arith.cmpi eq, %c16_i32, %c0_i32 : i32
    %c1_i32 = arith.constant 1 : i32
    %8 = arith.select %7, %c1_i32, %c16_i32 : i32
    %9 = vector.broadcast %8 : i32 to vector<128x128xi32>
    %10 = arith.remsi %6, %9 : vector<128x128xi32>
    %c0_i32_4 = arith.constant 0 : i32
    %11 = vector.broadcast %c0_i32_4 : i32 to vector<128x128xi32>
    %12 = arith.cmpi ne, %10, %11 : vector<128x128xi32>
    %c0_i32_5 = arith.constant 0 : i32
    %13 = vector.broadcast %c0_i32_5 : i32 to vector<128x128xi32>
    %14 = arith.cmpi slt, %10, %13 : vector<128x128xi32>
    %c0_i32_6 = arith.constant 0 : i32
    %15 = arith.cmpi slt, %8, %c0_i32_6 : i32
    %16 = vector.broadcast %15 : i1 to vector<128x128xi1>
    %17 = vector.broadcast %16 : vector<128x128xi1> to vector<128x128xi1>
    %18 = arith.xori %14, %17 : vector<128x128xi1>
    %19 = arith.andi %18, %12 : vector<128x128xi1>
    %20 = vector.broadcast %8 : i32 to vector<128x128xi32>
    %21 = arith.addi %10, %20 : vector<128x128xi32>
    %22 = arith.select %19, %21, %10 : vector<128x128xi1>, vector<128x128xi32>
    %c0_i32_7 = arith.constant 0 : i32
    %23 = vector.broadcast %c0_i32_7 : i32 to vector<128x128xi32>
    %24 = arith.cmpi ne, %22, %23 : vector<128x128xi32>
    %25 = arith.extui %24 : vector<128x128xi1> to vector<128x128xi32>
    %26 = arith.sitofp %25 : vector<128x128xi32> to vector<128x128xf32>
    %c15_i32 = arith.constant 15 : i32
    %27 = vector.broadcast %c15_i32 : i32 to vector<128x128xi32>
    %28 = arith.cmpi ne, %22, %27 : vector<128x128xi32>
    %29 = arith.extui %28 : vector<128x128xi1> to vector<128x128xi32>
    %30 = arith.sitofp %29 : vector<128x128xi32> to vector<128x128xf32>
    %c0_8 = arith.constant 0 : index
    %c0_9 = arith.constant 0 : index
    %c0_10 = arith.constant 0 : index
    %31 = vector.load %arg2[%c0_8, %c0_9, %c0_10] : memref<2x384x128xbf16, #tpu.memory_space<vmem>>, vector<1x384x128xbf16>
    %32 = vector.shape_cast %31 : vector<1x384x128xbf16> to vector<384x128xbf16>
    %c1_i32_11 = arith.constant 1 : i32
    %33 = tpu.dynamic_rotate %1 by %c1_i32_11 dim 0 : vector<128x128xf32>, i32 -> vector<128x128xf32>
    %34 = arith.mulf %33, %26 : vector<128x128xf32>
    %c127_i32 = arith.constant 127 : i32
    %35 = tpu.dynamic_rotate %1 by %c127_i32 dim 0 : vector<128x128xf32>, i32 -> vector<128x128xf32>
    %36 = arith.mulf %35, %30 : vector<128x128xf32>
    %37 = tpu.concatenate %34, %1, %36 in 1 : vector<128x128xf32>, vector<128x128xf32>, vector<128x128xf32> -> vector<128x384xf32>
    %38 = arith.truncf %37 : vector<128x384xf32> to vector<128x384xbf16>
    %cst = arith.constant dense<0.000000e+00> : vector<128x128xf32>
    %39 = tpu.matmul %38, %32, %cst {dimension_numbers = #tpu.dot_dimension_numbers<[1], [0], [0], [1], [0, 0, 1, 1], [], []>} : vector<128x384xbf16>, vector<384x128xbf16>, vector<128x128xf32> -> vector<128x128xf32>
    %40 = vector.broadcast %3 : vector<1x128xf32> to vector<128x128xf32>
    %41 = arith.addf %39, %40 : vector<128x128xf32>
    %cst_12 = arith.constant 0.000000e+00 : f32
    %42 = vector.broadcast %cst_12 : f32 to vector<128x128xf32>
    %43 = arith.cmpf oge, %41, %42 : vector<128x128xf32>
    %44 = vector.broadcast %5 : vector<1x128xf32> to vector<128x128xf32>
    %45 = arith.mulf %44, %41 : vector<128x128xf32>
    %46 = arith.select %43, %41, %45 : vector<128x128xi1>, vector<128x128xf32>
    %c1 = arith.constant 1 : index
    %c0_13 = arith.constant 0 : index
    %c0_14 = arith.constant 0 : index
    %47 = vector.load %arg2[%c1, %c0_13, %c0_14] : memref<2x384x128xbf16, #tpu.memory_space<vmem>>, vector<1x384x128xbf16>
    %48 = vector.shape_cast %47 : vector<1x384x128xbf16> to vector<384x128xbf16>
    %c1_i32_15 = arith.constant 1 : i32
    %49 = tpu.dynamic_rotate %46 by %c1_i32_15 dim 0 : vector<128x128xf32>, i32 -> vector<128x128xf32>
    %50 = arith.mulf %49, %26 : vector<128x128xf32>
    %c127_i32_16 = arith.constant 127 : i32
    %51 = tpu.dynamic_rotate %46 by %c127_i32_16 dim 0 : vector<128x128xf32>, i32 -> vector<128x128xf32>
    %52 = arith.mulf %51, %30 : vector<128x128xf32>
    %53 = tpu.concatenate %50, %46, %52 in 1 : vector<128x128xf32>, vector<128x128xf32>, vector<128x128xf32> -> vector<128x384xf32>
    %54 = arith.truncf %53 : vector<128x384xf32> to vector<128x384xbf16>
    %cst_17 = arith.constant dense<0.000000e+00> : vector<128x128xf32>
    %55 = tpu.matmul %54, %48, %cst_17 {dimension_numbers = #tpu.dot_dimension_numbers<[1], [0], [0], [1], [0, 0, 1, 1], [], []>} : vector<128x384xbf16>, vector<384x128xbf16>, vector<128x128xf32> -> vector<128x128xf32>
    %56 = vector.broadcast %4 : vector<1x128xf32> to vector<128x128xf32>
    %57 = arith.addf %55, %56 : vector<128x128xf32>
    %58 = arith.addf %1, %57 : vector<128x128xf32>
    %59 = vector.shape_cast %58 : vector<128x128xf32> to vector<8x16x128xf32>
    %c0_18 = arith.constant 0 : index
    %c0_19 = arith.constant 0 : index
    %c0_20 = arith.constant 0 : index
    %60 = vector.load %arg4[%c0_18, %c0_19, %c0_20] : memref<8x16x128xf32, #tpu.memory_space<vmem>>, vector<8x16x128xf32>
    tpu.vector_store %arg4[%c0_18, %c0_19, %c0_20], %59 {strides = array<i32>} : memref<8x16x128xf32, #tpu.memory_space<vmem>>, vector<8x16x128xf32>,
    return
  }
  func.func @transform_0(%arg0: i32) -> (i32, i32, i32) {
    %c0_i32 = arith.constant 0 : i32
    %c0_i32_0 = arith.constant 0 : i32
    %c0_i32_1 = arith.constant 0 : i32
    return %arg0, %c0_i32, %c0_i32_0 : i32, i32, i32
  }
  func.func @transform_1(%arg0: i32) -> (i32, i32, i32) {
    %c0_i32 = arith.constant 0 : i32
    %c0_i32_0 = arith.constant 0 : i32
    %c0_i32_1 = arith.constant 0 : i32
    %c0_i32_2 = arith.constant 0 : i32
    return %c0_i32, %c0_i32_0, %c0_i32_1 : i32, i32, i32
  }
  func.func @transform_2(%arg0: i32) -> (i32, i32) {
    %c0_i32 = arith.constant 0 : i32
    %c0_i32_0 = arith.constant 0 : i32
    %c0_i32_1 = arith.constant 0 : i32
    return %c0_i32, %c0_i32_0 : i32, i32
  }
  func.func @transform_3(%arg0: i32) -> (i32, i32, i32) {
    %c0_i32 = arith.constant 0 : i32
    %c0_i32_0 = arith.constant 0 : i32
    %c0_i32_1 = arith.constant 0 : i32
    return %arg0, %c0_i32, %c0_i32_0 : i32, i32, i32
  }
}

</mosaic_0001>

<llo_original>
// kernel: tpu_custom_call.1
$region0: #{tpu_custom_call.1}
  #allocation0 [shape = 'u32[]', space=smem, size = 0x4, offset = 0x4, fixed_abs, tag = 'smem constant byte address 0x4 - core index']
  #allocation1 [shape = 'u32[144,128]{1,0:T(1,128)}', space=vmem, size = 0x12000, scoped, tag = 'internal scratch']
  %s0 = inlined_call_operand.hbm [shape: f32[8,16,128], index: 0, kind: input, shape index: {}]
  %s1 = inlined_call_operand.hbm [shape: bf16[2,384,128], index: 1, kind: input, shape index: {}]
  %s2 = inlined_call_operand.hbm [shape: f32[3,128], index: 2, kind: input, shape index: {}]
  %s3 = inlined_call_operand.hbm [shape: f32[8,16,128], index: 3, kind: output, shape index: {}]
  %s4 = sld [smem:[#allocation0]]
  $region34: #{tpu_custom_call.1} parent=0
    _
  %s6 = ssub.s32 1, %s4
  %s7 = scalar_select 0, %s6, %s4
  $region1: #{tpu_custom_call.1} parent=0
    #allocation2 [shape = 'u8[65536]{0}', space=vmem, size = 0x10000, scoped, tag = 'input window, operand 0, single buffered']
    #allocation3 [shape = 's32[1]{0}', space=sflag, size = 0x4, scoped, tag = 'scoped memory for tpu_custom_call.1']
    #allocation4 [shape = 's32[1]{0}', space=sflag, size = 0x4, scoped, tag = 'scoped memory for tpu_custom_call.1']
    #allocation5 [shape = 'u8[196608]{0}', space=vmem, size = 0x30000, scoped, tag = 'input window, operand 1, single buffered']
    #allocation6 [shape = 's32[1]{0}', space=sflag, size = 0x4, scoped, tag = 'scoped memory for tpu_custom_call.1']
    #allocation7 [shape = 'u8[2048]{0}', space=vmem, size = 0x800, scoped, tag = 'input window, operand 2, single buffered']
    #allocation8 [shape = 'u8[65536]{0}', space=vmem, size = 0x10000, scoped, tag = 'output window, operand 0, single buffered']
    %8 = vsyncpa [#allocation3], 0
    %9 = vsyncpa [#allocation6], 0
    %10 = vsyncpa [#allocation4], 0
    // Predicated region
    $region2: #{tpu_custom_call.1} parent=1 // pred_check
      _
    $region3: #{tpu_custom_call.1} parent=1 // pred_check_branch
      %12 = sbr.rel (0) target = $region5
    $region4: #{tpu_custom_call.1} parent=1 // pred_region
      %s14 = ssub.s32 2048, 2048
      %15 = vsyncadd [#allocation3], %s14
      %s16 = sshll.u32 [#allocation2], 4
      %s17 = int_to_ptr.vmem [resolvable:$true] %s16
      %22 = dma.hbm_to_vmem [thread:$0]  %s0, 2048, %s17, [#allocation3], 128, 128, 8
    $region5: #{tpu_custom_call.1} parent=1 // pred_fallthru
      _
    // Predicated region
    $region6: #{tpu_custom_call.1} parent=1 // pred_check
      _
    $region7: #{tpu_custom_call.1} parent=1 // pred_check_branch
      %24 = sbr.rel (0) target = $region9
    $region8: #{tpu_custom_call.1} parent=1 // pred_region
      %s26 = ssub.s32 6144, 6144
      %27 = vsyncadd [#allocation6], %s26
      %s28 = sshll.u32 [#allocation5], 4
      %s29 = int_to_ptr.vmem [resolvable:$true] %s28
      %34 = dma.hbm_to_vmem [thread:$0]  %s1, 6144, %s29, [#allocation6], 64, 64, 4
    $region9: #{tpu_custom_call.1} parent=1 // pred_fallthru
      _
    // Predicated region
    $region10: #{tpu_custom_call.1} parent=1 // pred_check
      _
    $region11: #{tpu_custom_call.1} parent=1 // pred_check_branch
      %36 = sbr.rel (0) target = $region13
    $region12: #{tpu_custom_call.1} parent=1 // pred_region
      %s38 = ssub.s32 64, 64
      %39 = vsyncadd [#allocation6], %s38
      %s41 = sshll.u32 [#allocation7], 4
      %s42 = int_to_ptr.vmem [resolvable:$true] %s41
      %44 = dma.hbm_to_vmem [thread:$0]  %s2, 64, %s42, [#allocation6]
    $region13: #{tpu_custom_call.1} parent=1 // pred_fallthru
      _
    // Predicated region
    $region14: #{tpu_custom_call.1} parent=1 // pred_check
      _
    $region15: #{tpu_custom_call.1} parent=1 // pred_check_branch
      %46 = sbr.rel (0) target = $region17
    $region16: #{tpu_custom_call.1} parent=1 // pred_region
      %47 = dma.done [#allocation3], 2048
    $region17: #{tpu_custom_call.1} parent=1 // pred_fallthru
      _
    // Predicated region
    $region18: #{tpu_custom_call.1} parent=1 // pred_check
      _
    $region19: #{tpu_custom_call.1} parent=1 // pred_check_branch
      %49 = sbr.rel (0) target = $region21
    $region20: #{tpu_custom_call.1} parent=1 // pred_region
      %50 = dma.done [#allocation6], 6144
    $region21: #{tpu_custom_call.1} parent=1 // pred_fallthru
      _
    // Predicated region
    $region22: #{tpu_custom_call.1} parent=1 // pred_check
      _
    $region23: #{tpu_custom_call.1} parent=1 // pred_check_branch
      %52 = sbr.rel (0) target = $region25
    $region24: #{tpu_custom_call.1} parent=1 // pred_region
      %53 = dma.done [#allocation6], 64
    $region25: #{tpu_custom_call.1} parent=1 // pred_fallthru
      _
    %v55 = vld [vmem:[#allocation2] sm:$0xff]
    %v56 = vld [vmem:[#allocation2 + $0x8] sm:$0xff]
    %v57 = vld [vmem:[#allocation2 + $0x10] sm:$0xff]
    %v58 = vld [vmem:[#allocation2 + $0x18] sm:$0xff]
    %v59 = vld [vmem:[#allocation2 + $0x20] sm:$0xff]
    %v60 = vld [vmem:[#allocation2 + $0x28] sm:$0xff]
    %v61 = vld [vmem:[#allocation2 + $0x30] sm:$0xff]
    %v62 = vld [vmem:[#allocation2 + $0x38] sm:$0xff]
    %v63 = vld [vmem:[#allocation2 + $0x40] sm:$0xff]
    %v64 = vld [vmem:[#allocation2 + $0x48] sm:$0xff]
    %v65 = vld [vmem:[#allocation2 + $0x50] sm:$0xff]
    %v66 = vld [vmem:[#allocation2 + $0x58] sm:$0xff]
    %v67 = vld [vmem:[#allocation2 + $0x60] sm:$0xff]
    %v68 = vld [vmem:[#allocation2 + $0x68] sm:$0xff]
    %v69 = vld [vmem:[#allocation2 + $0x70] sm:$0xff]
    %v70 = vld [vmem:[#allocation2 + $0x78] sm:$0xff]
    %v71 = vld [vmem:[#allocation7] sm:$0x7]
    %v72 = vlaneseq
    %v73 = vshrl.u32 %v72, 7
    %v74 = vadd.s32 %v73, 8
    %v75 = vadd.s32 %v73, 16
    %v76 = vadd.s32 %v73, 24
    %v77 = vadd.s32 %v73, 32
    %v78 = vadd.s32 %v73, 40
    %v79 = vadd.s32 %v73, 48
    %v80 = vadd.s32 %v73, 56
    %v81 = vadd.s32 %v73, 64
    %v82 = vadd.s32 %v73, 72
    %v83 = vadd.s32 %v73, 80
    %v84 = vadd.s32 %v73, 88
    %v85 = vadd.s32 %v73, 96
    %v86 = vadd.s32 %v73, 104
    %v87 = vadd.s32 %v73, 112
    %v88 = vadd.s32 %v73, 120
    %vm89 = vcmp.lt.s32.totalorder %v73, 0
    %v90 = vsub.s32 0, %v73
    %v91 = vsel %vm89, %v90, %v73
    %v92 = vshrl.u32 %v91, 4
    %v93 = vand.u32 %v91, 15
    %v94 = vsub.s32 0, %v93
    %v95 = vsel %vm89, %v94, %v93
    %vm96 = vcmp.lt.s32.totalorder %v74, 0
    %v97 = vsub.s32 0, %v74
    %v98 = vsel %vm96, %v97, %v74
    %v99 = vshrl.u32 %v98, 4
    %v100 = vand.u32 %v98, 15
    %v101 = vsub.s32 0, %v100
    %v102 = vsel %vm96, %v101, %v100
    %vm103 = vcmp.lt.s32.totalorder %v75, 0
    %v104 = vsub.s32 0, %v75
    %v105 = vsel %vm103, %v104, %v75
    %v106 = vshrl.u32 %v105, 4
    %v107 = vand.u32 %v105, 15
    %v108 = vsub.s32 0, %v107
    %v109 = vsel %vm103, %v108, %v107
    %vm110 = vcmp.lt.s32.totalorder %v76, 0
    %v111 = vsub.s32 0, %v76
    %v112 = vsel %vm110, %v111, %v76
    %v113 = vshrl.u32 %v112, 4
    %v114 = vand.u32 %v112, 15
    %v115 = vsub.s32 0, %v114
    %v116 = vsel %vm110, %v115, %v114
    %vm117 = vcmp.lt.s32.totalorder %v77, 0
    %v118 = vsub.s32 0, %v77
    %v119 = vsel %vm117, %v118, %v77
    %v120 = vshrl.u32 %v119, 4
    %v121 = vand.u32 %v119, 15
    %v122 = vsub.s32 0, %v121
    %v123 = vsel %vm117, %v122, %v121
    %vm124 = vcmp.lt.s32.totalorder %v78, 0
    %v125 = vsub.s32 0, %v78
    %v126 = vsel %vm124, %v125, %v78
    %v127 = vshrl.u32 %v126, 4
    %v128 = vand.u32 %v126, 15
    %v129 = vsub.s32 0, %v128
    %v130 = vsel %vm124, %v129, %v128
    %vm131 = vcmp.lt.s32.totalorder %v79, 0
    %v132 = vsub.s32 0, %v79
    %v133 = vsel %vm131, %v132, %v79
    %v134 = vshrl.u32 %v133, 4
    %v135 = vand.u32 %v133, 15
    %v136 = vsub.s32 0, %v135
    %v137 = vsel %vm131, %v136, %v135
    %vm138 = vcmp.lt.s32.totalorder %v80, 0
    %v139 = vsub.s32 0, %v80
    %v140 = vsel %vm138, %v139, %v80
    %v141 = vshrl.u32 %v140, 4
    %v142 = vand.u32 %v140, 15
    %v143 = vsub.s32 0, %v142
    %v144 = vsel %vm138, %v143, %v142
    %vm145 = vcmp.lt.s32.totalorder %v81, 0
    %v146 = vsub.s32 0, %v81
    %v147 = vsel %vm145, %v146, %v81
    %v148 = vshrl.u32 %v147, 4
    %v149 = vand.u32 %v147, 15
    %v150 = vsub.s32 0, %v149
    %v151 = vsel %vm145, %v150, %v149
    %vm152 = vcmp.lt.s32.totalorder %v82, 0
    %v153 = vsub.s32 0, %v82
    %v154 = vsel %vm152, %v153, %v82
    %v155 = vshrl.u32 %v154, 4
    %v156 = vand.u32 %v154, 15
    %v157 = vsub.s32 0, %v156
    %v158 = vsel %vm152, %v157, %v156
    %vm159 = vcmp.lt.s32.totalorder %v83, 0
    %v160 = vsub.s32 0, %v83
    %v161 = vsel %vm159, %v160, %v83
    %v162 = vshrl.u32 %v161, 4
    %v163 = vand.u32 %v161, 15
    %v164 = vsub.s32 0, %v163
    %v165 = vsel %vm159, %v164, %v163
    %vm166 = vcmp.lt.s32.totalorder %v84, 0
    %v167 = vsub.s32 0, %v84
    %v168 = vsel %vm166, %v167, %v84
    %v169 = vshrl.u32 %v168, 4
    %v170 = vand.u32 %v168, 15
    %v171 = vsub.s32 0, %v170
    %v172 = vsel %vm166, %v171, %v170
    %vm173 = vcmp.lt.s32.totalorder %v85, 0
    %v174 = vsub.s32 0, %v85
    %v175 = vsel %vm173, %v174, %v85
    %v176 = vshrl.u32 %v175, 4
    %v177 = vand.u32 %v175, 15
    %v178 = vsub.s32 0, %v177
    %v179 = vsel %vm173, %v178, %v177
    %vm180 = vcmp.lt.s32.totalorder %v86, 0
    %v181 = vsub.s32 0, %v86
    %v182 = vsel %vm180, %v181, %v86
    %v183 = vshrl.u32 %v182, 4
    %v184 = vand.u32 %v182, 15
    %v185 = vsub.s32 0, %v184
    %v186 = vsel %vm180, %v185, %v184
    %vm187 = vcmp.lt.s32.totalorder %v87, 0
    %v188 = vsub.s32 0, %v87
    %v189 = vsel %vm187, %v188, %v87
    %v190 = vshrl.u32 %v189, 4
    %v191 = vand.u32 %v189, 15
    %v192 = vsub.s32 0, %v191
    %v193 = vsel %vm187, %v192, %v191
    %vm194 = vcmp.lt.s32.totalorder %v88, 0
    %v195 = vsub.s32 0, %v88
    %v196 = vsel %vm194, %v195, %v88
    %v197 = vshrl.u32 %v196, 4
    %v198 = vand.u32 %v196, 15
    %v199 = vsub.s32 0, %v198
    %v200 = vsel %vm194, %v199, %v198
    %vm201 = vcmp.ne.s32.totalorder %v95, 0
    %vm202 = vcmp.ne.s32.totalorder %v102, 0
    %vm203 = vcmp.ne.s32.totalorder %v109, 0
    %vm204 = vcmp.ne.s32.totalorder %v116, 0
    %vm205 = vcmp.ne.s32.totalorder %v123, 0
    %vm206 = vcmp.ne.s32.totalorder %v130, 0
    %vm207 = vcmp.ne.s32.totalorder %v137, 0
    %vm208 = vcmp.ne.s32.totalorder %v144, 0
    %vm209 = vcmp.ne.s32.totalorder %v151, 0
    %vm210 = vcmp.ne.s32.totalorder %v158, 0
    %vm211 = vcmp.ne.s32.totalorder %v165, 0
    %vm212 = vcmp.ne.s32.totalorder %v172, 0
    %vm213 = vcmp.ne.s32.totalorder %v179, 0
    %vm214 = vcmp.ne.s32.totalorder %v186, 0
    %vm215 = vcmp.ne.s32.totalorder %v193, 0
    %vm216 = vcmp.ne.s32.totalorder %v200, 0
    %vm217 = vcmp.lt.s32.totalorder %v95, 0
    %vm218 = vcmp.lt.s32.totalorder %v102, 0
    %vm219 = vcmp.lt.s32.totalorder %v109, 0
    %vm220 = vcmp.lt.s32.totalorder %v116, 0
    %vm221 = vcmp.lt.s32.totalorder %v123, 0
    %vm222 = vcmp.lt.s32.totalorder %v130, 0
    %vm223 = vcmp.lt.s32.totalorder %v137, 0
    %vm224 = vcmp.lt.s32.totalorder %v144, 0
    %vm225 = vcmp.lt.s32.totalorder %v151, 0
    %vm226 = vcmp.lt.s32.totalorder %v158, 0
    %vm227 = vcmp.lt.s32.totalorder %v165, 0
    %vm228 = vcmp.lt.s32.totalorder %v172, 0
    %vm229 = vcmp.lt.s32.totalorder %v179, 0
    %vm230 = vcmp.lt.s32.totalorder %v186, 0
    %vm231 = vcmp.lt.s32.totalorder %v193, 0
    %vm232 = vcmp.lt.s32.totalorder %v200, 0
    %vm233 = vmand %vm217, %vm201
    %vm234 = vmand %vm218, %vm202
    %vm235 = vmand %vm219, %vm203
    %vm236 = vmand %vm220, %vm204
    %vm237 = vmand %vm221, %vm205
    %vm238 = vmand %vm222, %vm206
    %vm239 = vmand %vm223, %vm207
    %vm240 = vmand %vm224, %vm208
    %vm241 = vmand %vm225, %vm209
    %vm242 = vmand %vm226, %vm210
    %vm243 = vmand %vm227, %vm211
    %vm244 = vmand %vm228, %vm212
    %vm245 = vmand %vm229, %vm213
    %vm246 = vmand %vm230, %vm214
    %vm247 = vmand %vm231, %vm215
    %vm248 = vmand %vm232, %vm216
    %v249 = vadd.s32 %v95, 16
    %v250 = vadd.s32 %v102, 16
    %v251 = vadd.s32 %v109, 16
    %v252 = vadd.s32 %v116, 16
    %v253 = vadd.s32 %v123, 16
    %v254 = vadd.s32 %v130, 16
    %v255 = vadd.s32 %v137, 16
    %v256 = vadd.s32 %v144, 16
    %v257 = vadd.s32 %v151, 16
    %v258 = vadd.s32 %v158, 16
    %v259 = vadd.s32 %v165, 16
    %v260 = vadd.s32 %v172, 16
    %v261 = vadd.s32 %v179, 16
    %v262 = vadd.s32 %v186, 16
    %v263 = vadd.s32 %v193, 16
    %v264 = vadd.s32 %v200, 16
    %v265 = vsel %vm233, %v249, %v95
    %v266 = vsel %vm234, %v250, %v102
    %v267 = vsel %vm235, %v251, %v109
    %v268 = vsel %vm236, %v252, %v116
    %v269 = vsel %vm237, %v253, %v123
    %v270 = vsel %vm238, %v254, %v130
    %v271 = vsel %vm239, %v255, %v137
    %v272 = vsel %vm240, %v256, %v144
    %v273 = vsel %vm241, %v257, %v151
    %v274 = vsel %vm242, %v258, %v158
    %v275 = vsel %vm243, %v259, %v165
    %v276 = vsel %vm244, %v260, %v172
    %v277 = vsel %vm245, %v261, %v179
    %v278 = vsel %vm246, %v262, %v186
    %v279 = vsel %vm247, %v263, %v193
    %v280 = vsel %vm248, %v264, %v200
    %vm281 = vcmp.ne.s32.totalorder %v265, 0
    %vm282 = vcmp.ne.s32.totalorder %v266, 0
    %vm283 = vcmp.ne.s32.totalorder %v267, 0
    %vm284 = vcmp.ne.s32.totalorder %v268, 0
    %vm285 = vcmp.ne.s32.totalorder %v269, 0
    %vm286 = vcmp.ne.s32.totalorder %v270, 0
    %vm287 = vcmp.ne.s32.totalorder %v271, 0
    %vm288 = vcmp.ne.s32.totalorder %v272, 0
    %vm289 = vcmp.ne.s32.totalorder %v273, 0
    %vm290 = vcmp.ne.s32.totalorder %v274, 0
    %vm291 = vcmp.ne.s32.totalorder %v275, 0
    %vm292 = vcmp.ne.s32.totalorder %v276, 0
    %vm293 = vcmp.ne.s32.totalorder %v277, 0
    %vm294 = vcmp.ne.s32.totalorder %v278, 0
    %vm295 = vcmp.ne.s32.totalorder %v279, 0
    %vm296 = vcmp.ne.s32.totalorder %v280, 0
    %v297 = vsel %vm281, 1, 0
    %v298 = vsel %vm282, 1, 0
    %v299 = vsel %vm283, 1, 0
    %v300 = vsel %vm284, 1, 0
    %v301 = vsel %vm285, 1, 0
    %v302 = vsel %vm286, 1, 0
    %v303 = vsel %vm287, 1, 0
    %v304 = vsel %vm288, 1, 0
    %v305 = vsel %vm289, 1, 0
    %v306 = vsel %vm290, 1, 0
    %v307 = vsel %vm291, 1, 0
    %v308 = vsel %vm292, 1, 0
    %v309 = vsel %vm293, 1, 0
    %v310 = vsel %vm294, 1, 0
    %v311 = vsel %vm295, 1, 0
    %v312 = vsel %vm296, 1, 0
    %v313 = vcvt.s32.f32 %v297
    %v314 = vcvt.s32.f32 %v298
    %v315 = vcvt.s32.f32 %v299
    %v316 = vcvt.s32.f32 %v300
    %v317 = vcvt.s32.f32 %v301
    %v318 = vcvt.s32.f32 %v302
    %v319 = vcvt.s32.f32 %v303
    %v320 = vcvt.s32.f32 %v304
    %v321 = vcvt.s32.f32 %v305
    %v322 = vcvt.s32.f32 %v306
    %v323 = vcvt.s32.f32 %v307
    %v324 = vcvt.s32.f32 %v308
    %v325 = vcvt.s32.f32 %v309
    %v326 = vcvt.s32.f32 %v310
    %v327 = vcvt.s32.f32 %v311
    %v328 = vcvt.s32.f32 %v312
    %vm329 = vcmp.ne.s32.totalorder %v265, 15
    %vm330 = vcmp.ne.s32.totalorder %v266, 15
    %vm331 = vcmp.ne.s32.totalorder %v267, 15
    %vm332 = vcmp.ne.s32.totalorder %v268, 15
    %vm333 = vcmp.ne.s32.totalorder %v269, 15
    %vm334 = vcmp.ne.s32.totalorder %v270, 15
    %vm335 = vcmp.ne.s32.totalorder %v271, 15
    %vm336 = vcmp.ne.s32.totalorder %v272, 15
    %vm337 = vcmp.ne.s32.totalorder %v273, 15
    %vm338 = vcmp.ne.s32.totalorder %v274, 15
    %vm339 = vcmp.ne.s32.totalorder %v275, 15
    %vm340 = vcmp.ne.s32.totalorder %v276, 15
    %vm341 = vcmp.ne.s32.totalorder %v277, 15
    %vm342 = vcmp.ne.s32.totalorder %v278, 15
    %vm343 = vcmp.ne.s32.totalorder %v279, 15
    %vm344 = vcmp.ne.s32.totalorder %v280, 15
    %v345 = vsel %vm329, 1, 0
    %v346 = vsel %vm330, 1, 0
    %v347 = vsel %vm331, 1, 0
    %v348 = vsel %vm332, 1, 0
    %v349 = vsel %vm333, 1, 0
    %v350 = vsel %vm334, 1, 0
    %v351 = vsel %vm335, 1, 0
    %v352 = vsel %vm336, 1, 0
    %v353 = vsel %vm337, 1, 0
    %v354 = vsel %vm338, 1, 0
    %v355 = vsel %vm339, 1, 0
    %v356 = vsel %vm340, 1, 0
    %v357 = vsel %vm341, 1, 0
    %v358 = vsel %vm342, 1, 0
    %v359 = vsel %vm343, 1, 0
    %v360 = vsel %vm344, 1, 0
    %v361 = vcvt.s32.f32 %v345
    %v362 = vcvt.s32.f32 %v346
    %v363 = vcvt.s32.f32 %v347
    %v364 = vcvt.s32.f32 %v348
    %v365 = vcvt.s32.f32 %v349
    %v366 = vcvt.s32.f32 %v350
    %v367 = vcvt.s32.f32 %v351
    %v368 = vcvt.s32.f32 %v352
    %v369 = vcvt.s32.f32 %v353
    %v370 = vcvt.s32.f32 %v354
    %v371 = vcvt.s32.f32 %v355
    %v372 = vcvt.s32.f32 %v356
    %v373 = vcvt.s32.f32 %v357
    %v374 = vcvt.s32.f32 %v358
    %v375 = vcvt.s32.f32 %v359
    %v376 = vcvt.s32.f32 %v360
    %v377 = vld [vmem:[#allocation5] sm:$0xf]
    %v378 = vld [vmem:[#allocation5 + $0x4] sm:$0xf]
    %v379 = vld [vmem:[#allocation5 + $0x8] sm:$0xf]
    %v380 = vld [vmem:[#allocation5 + $0xc] sm:$0xf]
    %v381 = vld [vmem:[#allocation5 + $0x10] sm:$0xf]
    %v382 = vld [vmem:[#allocation5 + $0x14] sm:$0xf]
    %v383 = vld [vmem:[#allocation5 + $0x18] sm:$0xf]
    %v384 = vld [vmem:[#allocation5 + $0x1c] sm:$0xf]
    %v385 = vld [vmem:[#allocation5 + $0x20] sm:$0xf]
    %v386 = vld [vmem:[#allocation5 + $0x24] sm:$0xf]
    %v387 = vld [vmem:[#allocation5 + $0x28] sm:$0xf]
    %v388 = vld [vmem:[#allocation5 + $0x2c] sm:$0xf]
    %v389 = vld [vmem:[#allocation5 + $0x30] sm:$0xf]
    %v390 = vld [vmem:[#allocation5 + $0x34] sm:$0xf]
    %v391 = vld [vmem:[#allocation5 + $0x38] sm:$0xf]
    %v392 = vld [vmem:[#allocation5 + $0x3c] sm:$0xf]
    %v393 = vld [vmem:[#allocation5 + $0x40] sm:$0xf]
    %v394 = vld [vmem:[#allocation5 + $0x44] sm:$0xf]
    %v395 = vld [vmem:[#allocation5 + $0x48] sm:$0xf]
    %v396 = vld [vmem:[#allocation5 + $0x4c] sm:$0xf]
    %v397 = vld [vmem:[#allocation5 + $0x50] sm:$0xf]
    %v398 = vld [vmem:[#allocation5 + $0x54] sm:$0xf]
    %v399 = vld [vmem:[#allocation5 + $0x58] sm:$0xf]
    %v400 = vld [vmem:[#allocation5 + $0x5c] sm:$0xf]
    %v401 = vld [vmem:[#allocation5 + $0x60] sm:$0xf]
    %v402 = vld [vmem:[#allocation5 + $0x64] sm:$0xf]
    %v403 = vld [vmem:[#allocation5 + $0x68] sm:$0xf]
    %v404 = vld [vmem:[#allocation5 + $0x6c] sm:$0xf]
    %v405 = vld [vmem:[#allocation5 + $0x70] sm:$0xf]
    %v406 = vld [vmem:[#allocation5 + $0x74] sm:$0xf]
    %v407 = vld [vmem:[#allocation5 + $0x78] sm:$0xf]
    %v408 = vld [vmem:[#allocation5 + $0x7c] sm:$0xf]
    %v409 = vld [vmem:[#allocation5 + $0x80] sm:$0xf]
    %v410 = vld [vmem:[#allocation5 + $0x84] sm:$0xf]
    %v411 = vld [vmem:[#allocation5 + $0x88] sm:$0xf]
    %v412 = vld [vmem:[#allocation5 + $0x8c] sm:$0xf]
    %v413 = vld [vmem:[#allocation5 + $0x90] sm:$0xf]
    %v414 = vld [vmem:[#allocation5 + $0x94] sm:$0xf]
    %v415 = vld [vmem:[#allocation5 + $0x98] sm:$0xf]
    %v416 = vld [vmem:[#allocation5 + $0x9c] sm:$0xf]
    %v417 = vld [vmem:[#allocation5 + $0xa0] sm:$0xf]
    %v418 = vld [vmem:[#allocation5 + $0xa4] sm:$0xf]
    %v419 = vld [vmem:[#allocation5 + $0xa8] sm:$0xf]
    %v420 = vld [vmem:[#allocation5 + $0xac] sm:$0xf]
    %v421 = vld [vmem:[#allocation5 + $0xb0] sm:$0xf]
    %v422 = vld [vmem:[#allocation5 + $0xb4] sm:$0xf]
    %v423 = vld [vmem:[#allocation5 + $0xb8] sm:$0xf]
    %v424 = vld [vmem:[#allocation5 + $0xbc] sm:$0xf]
    %v425 = vrot.slane %v55, 7
    %v426 = vrot.slane %v56, 7
    %v427 = vrot.slane %v57, 7
    %v428 = vrot.slane %v58, 7
    %v429 = vrot.slane %v59, 7
    %v430 = vrot.slane %v60, 7
    %v431 = vrot.slane %v61, 7
    %v432 = vrot.slane %v62, 7
    %v433 = vrot.slane %v63, 7
    %v434 = vrot.slane %v64, 7
    %v435 = vrot.slane %v65, 7
    %v436 = vrot.slane %v66, 7
    %v437 = vrot.slane %v67, 7
    %v438 = vrot.slane %v68, 7
    %v439 = vrot.slane %v69, 7
    %v440 = vrot.slane %v70, 7
    %vm441 = vcmp.lt.s32.totalorder %v73, 1
    %v442 = vsel %vm441, %v439, %v440
    %v443 = vsel %vm441, %v438, %v439
    %v444 = vsel %vm441, %v437, %v438
    %v445 = vsel %vm441, %v436, %v437
    %v446 = vsel %vm441, %v435, %v436
    %v447 = vsel %vm441, %v434, %v435
    %v448 = vsel %vm441, %v433, %v434
    %v449 = vsel %vm441, %v432, %v433
    %v450 = vsel %vm441, %v431, %v432
    %v451 = vsel %vm441, %v430, %v431
    %v452 = vsel %vm441, %v429, %v430
    %v453 = vsel %vm441, %v428, %v429
    %v454 = vsel %vm441, %v427, %v428
    %v455 = vsel %vm441, %v426, %v427
    %v456 = vsel %vm441, %v425, %v426
    %v457 = vsel %vm441, %v440, %v425
    %v458 = vmul.f32 %v457, %v313
    %v459 = vmul.f32 %v456, %v314
    %v460 = vmul.f32 %v455, %v315
    %v461 = vmul.f32 %v454, %v316
    %v462 = vmul.f32 %v453, %v317
    %v463 = vmul.f32 %v452, %v318
    %v464 = vmul.f32 %v451, %v319
    %v465 = vmul.f32 %v450, %v320
    %v466 = vmul.f32 %v449, %v321
    %v467 = vmul.f32 %v448, %v322
    %v468 = vmul.f32 %v447, %v323
    %v469 = vmul.f32 %v446, %v324
    %v470 = vmul.f32 %v445, %v325
    %v471 = vmul.f32 %v444, %v326
    %v472 = vmul.f32 %v443, %v327
    %v473 = vmul.f32 %v442, %v328
    %v474 = vrot.slane %v55, 1
    %v475 = vrot.slane %v56, 1
    %v476 = vrot.slane %v57, 1
    %v477 = vrot.slane %v58, 1
    %v478 = vrot.slane %v59, 1
    %v479 = vrot.slane %v60, 1
    %v480 = vrot.slane %v61, 1
    %v481 = vrot.slane %v62, 1
    %v482 = vrot.slane %v63, 1
    %v483 = vrot.slane %v64, 1
    %v484 = vrot.slane %v65, 1
    %v485 = vrot.slane %v66, 1
    %v486 = vrot.slane %v67, 1
    %v487 = vrot.slane %v68, 1
    %v488 = vrot.slane %v69, 1
    %v489 = vrot.slane %v70, 1
    %vm490 = vcmp.lt.s32.totalorder %v73, 7
    %v491 = vsel %vm490, %v488, %v489
    %v492 = vsel %vm490, %v487, %v488
    %v493 = vsel %vm490, %v486, %v487
    %v494 = vsel %vm490, %v485, %v486
    %v495 = vsel %vm490, %v484, %v485
    %v496 = vsel %vm490, %v483, %v484
    %v497 = vsel %vm490, %v482, %v483
    %v498 = vsel %vm490, %v481, %v482
    %v499 = vsel %vm490, %v480, %v481
    %v500 = vsel %vm490, %v479, %v480
    %v501 = vsel %vm490, %v478, %v479
    %v502 = vsel %vm490, %v477, %v478
    %v503 = vsel %vm490, %v476, %v477
    %v504 = vsel %vm490, %v475, %v476
    %v505 = vsel %vm490, %v474, %v475
    %v506 = vsel %vm490, %v489, %v474
    %v507 = vmul.f32 %v505, %v361
    %v508 = vmul.f32 %v504, %v362
    %v509 = vmul.f32 %v503, %v363
    %v510 = vmul.f32 %v502, %v364
    %v511 = vmul.f32 %v501, %v365
    %v512 = vmul.f32 %v500, %v366
    %v513 = vmul.f32 %v499, %v367
    %v514 = vmul.f32 %v498, %v368
    %v515 = vmul.f32 %v497, %v369
    %v516 = vmul.f32 %v496, %v370
    %v517 = vmul.f32 %v495, %v371
    %v518 = vmul.f32 %v494, %v372
    %v519 = vmul.f32 %v493, %v373
    %v520 = vmul.f32 %v492, %v374
    %v521 = vmul.f32 %v491, %v375
    %v522 = vmul.f32 %v506, %v376
    %v523 = vpack.c.bf16 %v459, %v458
    %v524 = vpack.c.bf16 %v56, %v55
    %v525 = vpack.c.bf16 %v508, %v507
    %v526 = vpack.c.bf16 %v461, %v460
    %v527 = vpack.c.bf16 %v58, %v57
    %v528 = vpack.c.bf16 %v510, %v509
    %v529 = vpack.c.bf16 %v463, %v462
    %v530 = vpack.c.bf16 %v60, %v59
    %v531 = vpack.c.bf16 %v512, %v511
    %v532 = vpack.c.bf16 %v465, %v464
    %v533 = vpack.c.bf16 %v62, %v61
    %v534 = vpack.c.bf16 %v514, %v513
    %v535 = vpack.c.bf16 %v467, %v466
    %v536 = vpack.c.bf16 %v64, %v63
    %v537 = vpack.c.bf16 %v516, %v515
    %v538 = vpack.c.bf16 %v469, %v468
    %v539 = vpack.c.bf16 %v66, %v65
    %v540 = vpack.c.bf16 %v518, %v517
    %v541 = vpack.c.bf16 %v471, %v470
    %v542 = vpack.c.bf16 %v68, %v67
    %v543 = vpack.c.bf16 %v520, %v519
    %v544 = vpack.c.bf16 %v473, %v472
    %v545 = vpack.c.bf16 %v70, %v69
    %v546 = vpack.c.bf16 %v522, %v521
    %v547 = vlaneseq
    %v548 = vshrl.u32 %v547, 7
    %v549 = vsub.s32 0, %v548
    %v550 = vrot.slane %v71, %v549
    %v599 = vunpack.c.l.b16 %v377
    %v600 = vunpack.c.l.b16 %v378
    %v601 = vunpack.c.l.b16 %v379
    %v602 = vunpack.c.l.b16 %v380
    %v603 = vunpack.c.l.b16 %v381
    %v604 = vunpack.c.l.b16 %v382
    %v605 = vunpack.c.l.b16 %v383
    %v606 = vunpack.c.l.b16 %v384
    %v607 = vunpack.c.l.b16 %v385
    %v608 = vunpack.c.l.b16 %v386
    %v609 = vunpack.c.l.b16 %v387
    %v610 = vunpack.c.l.b16 %v388
    %v611 = vunpack.c.l.b16 %v389
    %v612 = vunpack.c.l.b16 %v390
    %v613 = vunpack.c.l.b16 %v391
    %v614 = vunpack.c.l.b16 %v392
    %v615 = vunpack.c.l.b16 %v393
    %v616 = vunpack.c.l.b16 %v394
    %v617 = vunpack.c.l.b16 %v395
    %v618 = vunpack.c.l.b16 %v396
    %v619 = vunpack.c.l.b16 %v397
    %v620 = vunpack.c.l.b16 %v398
    %v621 = vunpack.c.l.b16 %v399
    %v622 = vunpack.c.l.b16 %v400
    %v623 = vunpack.c.l.b16 %v401
    %v624 = vunpack.c.l.b16 %v402
    %v625 = vunpack.c.l.b16 %v403
    %v626 = vunpack.c.l.b16 %v404
    %v627 = vunpack.c.l.b16 %v405
    %v628 = vunpack.c.l.b16 %v406
    %v629 = vunpack.c.l.b16 %v407
    %v630 = vunpack.c.l.b16 %v408
    %v631 = vunpack.c.l.b16 %v409
    %v632 = vunpack.c.l.b16 %v410
    %v633 = vunpack.c.l.b16 %v411
    %v634 = vunpack.c.l.b16 %v412
    %v635 = vunpack.c.l.b16 %v413
    %v636 = vunpack.c.l.b16 %v414
    %v637 = vunpack.c.l.b16 %v415
    %v638 = vunpack.c.l.b16 %v416
    %v639 = vunpack.c.l.b16 %v417
    %v640 = vunpack.c.l.b16 %v418
    %v641 = vunpack.c.l.b16 %v419
    %v642 = vunpack.c.l.b16 %v420
    %v643 = vunpack.c.l.b16 %v421
    %v644 = vunpack.c.l.b16 %v422
    %v645 = vunpack.c.l.b16 %v423
    %v646 = vunpack.c.l.b16 %v424
    %v647 = vpack.c.b16 %v600, %v599
    %v648 = vpack.c.b16 %v602, %v601
    %v649 = vpack.c.b16 %v604, %v603
    %v650 = vpack.c.b16 %v606, %v605
    %v651 = vpack.c.b16 %v608, %v607
    %v652 = vpack.c.b16 %v610, %v609
    %v653 = vpack.c.b16 %v612, %v611
    %v654 = vpack.c.b16 %v614, %v613
    %v655 = vpack.c.b16 %v616, %v615
    %v656 = vpack.c.b16 %v618, %v617
    %v657 = vpack.c.b16 %v620, %v619
    %v658 = vpack.c.b16 %v622, %v621
    %v659 = vpack.c.b16 %v624, %v623
    %v660 = vpack.c.b16 %v626, %v625
    %v661 = vpack.c.b16 %v628, %v627
    %v662 = vpack.c.b16 %v630, %v629
    %v663 = vpack.c.b16 %v632, %v631
    %v664 = vpack.c.b16 %v634, %v633
    %v665 = vpack.c.b16 %v636, %v635
    %v666 = vpack.c.b16 %v638, %v637
    %v667 = vpack.c.b16 %v640, %v639
    %v668 = vpack.c.b16 %v642, %v641
    %v669 = vpack.c.b16 %v644, %v643
    %v670 = vpack.c.b16 %v646, %v645
    %695 = vmatprep.subr.bf16.mxu0 0
    %696 = vmatpush1.bf16.msra.mxu0 %v654
    %697 = vmatprep.subr.bf16.mxu0 0
    %698 = vmatpush1.bf16.msra.mxu0 %v653
    %699 = vmatprep.subr.bf16.mxu0 0
    %700 = vmatpush1.bf16.msra.mxu0 %v652
    %701 = vmatprep.subr.bf16.mxu0 0
    %702 = vmatpush1.bf16.msra.mxu0 %v651
    %703 = vmatprep.subr.bf16.mxu0 0
    %704 = vmatpush1.bf16.msra.mxu0 %v650
    %705 = vmatprep.subr.bf16.mxu0 0
    %706 = vmatpush1.bf16.msra.mxu0 %v649
    %707 = vmatprep.subr.bf16.mxu0 0
    %708 = vmatpush1.bf16.msra.mxu0 %v648
    %709 = vmatprep.subr.bf16.mxu0 0
    %710 = vmatpush1.bf16.msra.mxu0 %v647
    %711 = vmatprep.subr.bf16.mxu0 0
    %712 = vmatpush2.bf16.msra.mxu0 %v662
    %713 = vmatprep.subr.bf16.mxu0 0
    %714 = vmatpush2.bf16.msra.mxu0 %v661
    %715 = vmatprep.subr.bf16.mxu0 0
    %716 = vmatpush2.bf16.msra.mxu0 %v660
    %717 = vmatprep.subr.bf16.mxu0 0
    %718 = vmatpush2.bf16.msra.mxu0 %v659
    %719 = vmatprep.subr.bf16.mxu0 0
    %720 = vmatpush2.bf16.msra.mxu0 %v658
    %721 = vmatprep.subr.bf16.mxu0 0
    %722 = vmatpush2.bf16.msra.mxu0 %v657
    %723 = vmatprep.subr.bf16.mxu0 0
    %724 = vmatpush2.bf16.msra.mxu0 %v656
    %725 = vmatprep.subr.bf16.mxu0 0
    %726 = vmatpush2.bf16.msra.mxu0 %v655
    %727 = vmatprep.mubr.bf16.mxu0 %v524
    %728 = vmatmul.mubr.bf16.gmra.mxu0 %v523
    %v729 = vpop.f32.mrf.mxu0
    %v730 = vadd.f32 %v550, %v729
    %v731 = vpop.f32.mrf.mxu0
    %v732 = vpop.f32.mrf.mxu0
    %v733 = vadd.f32 %v550, %v732
    %v734 = vpop.f32.mrf.mxu0
    %735 = vmatprep.mubr.bf16.mxu0 %v527
    %736 = vmatmul.mubr.bf16.gmra.mxu0 %v526
    %v737 = vpop.f32.mrf.mxu0
    %v738 = vadd.f32 %v550, %v737
    %v739 = vpop.f32.mrf.mxu0
    %v740 = vpop.f32.mrf.mxu0
    %v741 = vadd.f32 %v550, %v740
    %v742 = vpop.f32.mrf.mxu0
    %743 = vmatprep.mubr.bf16.mxu0 %v530
    %744 = vmatmul.mubr.bf16.gmra.mxu0 %v529
    %v745 = vpop.f32.mrf.mxu0
    %v746 = vadd.f32 %v550, %v745
    %v747 = vpop.f32.mrf.mxu0
    %v748 = vpop.f32.mrf.mxu0
    %v749 = vadd.f32 %v550, %v748
    %v750 = vpop.f32.mrf.mxu0
    %751 = vmatprep.mubr.bf16.mxu0 %v533
    %752 = vmatmul.mubr.bf16.gmra.mxu0 %v532
    %v753 = vpop.f32.mrf.mxu0
    %v754 = vadd.f32 %v550, %v753
    %v755 = vpop.f32.mrf.mxu0
    %v756 = vpop.f32.mrf.mxu0
    %v757 = vadd.f32 %v550, %v756
    %v758 = vpop.f32.mrf.mxu0
    %759 = vmatprep.mubr.bf16.mxu0 %v536
    %760 = vmatmul.mubr.bf16.gmra.mxu0 %v535
    %v761 = vpop.f32.mrf.mxu0
    %v762 = vadd.f32 %v550, %v761
    %v763 = vpop.f32.mrf.mxu0
    %v764 = vpop.f32.mrf.mxu0
    %v765 = vadd.f32 %v550, %v764
    %v766 = vpop.f32.mrf.mxu0
    %767 = vmatprep.mubr.bf16.mxu0 %v539
    %768 = vmatmul.mubr.bf16.gmra.mxu0 %v538
    %v769 = vpop.f32.mrf.mxu0
    %v770 = vadd.f32 %v550, %v769
    %v771 = vpop.f32.mrf.mxu0
    %v772 = vpop.f32.mrf.mxu0
    %v773 = vadd.f32 %v550, %v772
    %v774 = vpop.f32.mrf.mxu0
    %775 = vmatprep.mubr.bf16.mxu0 %v542
    %776 = vmatmul.mubr.bf16.gmra.mxu0 %v541
    %v777 = vpop.f32.mrf.mxu0
    %v778 = vadd.f32 %v550, %v777
    %v779 = vpop.f32.mrf.mxu0
    %v780 = vpop.f32.mrf.mxu0
    %v781 = vadd.f32 %v550, %v780
    %v782 = vpop.f32.mrf.mxu0
    %783 = vmatprep.mubr.bf16.mxu0 %v545
    %784 = vmatmul.mubr.bf16.gmra.mxu0 %v544
    %v785 = vpop.f32.mrf.mxu0
    %v786 = vadd.f32 %v550, %v785
    %v787 = vpop.f32.mrf.mxu0
    %v788 = vpop.f32.mrf.mxu0
    %v789 = vadd.f32 %v550, %v788
    %v790 = vpop.f32.mrf.mxu0
    %791 = vdwg.mxu0
    %792 = vmatprep.subr.bf16.mxu0 0
    %793 = vmatpush1.bf16.msra.mxu0 %v670
    %794 = vmatprep.subr.bf16.mxu0 0
    %795 = vmatpush1.bf16.msra.mxu0 %v669
    %796 = vmatprep.subr.bf16.mxu0 0
    %797 = vmatpush1.bf16.msra.mxu0 %v668
    %798 = vmatprep.subr.bf16.mxu0 0
    %799 = vmatpush1.bf16.msra.mxu0 %v667
    %800 = vmatprep.subr.bf16.mxu0 0
    %801 = vmatpush1.bf16.msra.mxu0 %v666
    %802 = vmatprep.subr.bf16.mxu0 0
    %803 = vmatpush1.bf16.msra.mxu0 %v665
    %804 = vmatprep.subr.bf16.mxu0 0
    %805 = vmatpush1.bf16.msra.mxu0 %v664
    %806 = vmatprep.subr.bf16.mxu0 0
    %807 = vmatpush1.bf16.msra.mxu0 %v663
    %808 = vmatprep.subr.bf16.mxu0 0
    %809 = vmatpush2.bf16.msra.mxu0 0
    %810 = vmatprep.subr.bf16.mxu0 0
    %811 = vmatpush2.bf16.msra.mxu0 0
    %812 = vmatprep.subr.bf16.mxu0 0
    %813 = vmatpush2.bf16.msra.mxu0 0
    %814 = vmatprep.subr.bf16.mxu0 0
    %815 = vmatpush2.bf16.msra.mxu0 0
    %816 = vmatprep.subr.bf16.mxu0 0
    %817 = vmatpush2.bf16.msra.mxu0 0
    %818 = vmatprep.subr.bf16.mxu0 0
    %819 = vmatpush2.bf16.msra.mxu0 0
    %820 = vmatprep.subr.bf16.mxu0 0
    %821 = vmatpush2.bf16.msra.mxu0 0
    %822 = vmatprep.subr.bf16.mxu0 0
    %823 = vmatpush2.bf16.msra.mxu0 0
    %824 = vmatprep.mubr.bf16.mxu0 0
    %825 = vmatmul.mubr.bf16.gmra.mxu0 %v525
    %v826 = vpop.f32.mrf.mxu0
    %v827 = vadd.f32 %v730, %v826
    %v828 = vpop.f32.mrf.mxu0
    %v829 = vpop.f32.mrf.mxu0
    %v830 = vadd.f32 %v733, %v829
    %v831 = vpop.f32.mrf.mxu0
    %832 = vmatprep.mubr.bf16.mxu0 0
    %833 = vmatmul.mubr.bf16.gmra.mxu0 %v528
    %v834 = vpop.f32.mrf.mxu0
    %v835 = vadd.f32 %v738, %v834
    %v836 = vpop.f32.mrf.mxu0
    %v837 = vpop.f32.mrf.mxu0
    %v838 = vadd.f32 %v741, %v837
    %v839 = vpop.f32.mrf.mxu0
    %840 = vmatprep.mubr.bf16.mxu0 0
    %841 = vmatmul.mubr.bf16.gmra.mxu0 %v531
    %v842 = vpop.f32.mrf.mxu0
    %v843 = vadd.f32 %v746, %v842
    %v844 = vpop.f32.mrf.mxu0
    %v845 = vpop.f32.mrf.mxu0
    %v846 = vadd.f32 %v749, %v845
    %v847 = vpop.f32.mrf.mxu0
    %848 = vmatprep.mubr.bf16.mxu0 0
    %849 = vmatmul.mubr.bf16.gmra.mxu0 %v534
    %v850 = vpop.f32.mrf.mxu0
    %v851 = vadd.f32 %v754, %v850
    %v852 = vpop.f32.mrf.mxu0
    %v853 = vpop.f32.mrf.mxu0
    %v854 = vadd.f32 %v757, %v853
    %v855 = vpop.f32.mrf.mxu0
    %856 = vmatprep.mubr.bf16.mxu0 0
    %857 = vmatmul.mubr.bf16.gmra.mxu0 %v537
    %v858 = vpop.f32.mrf.mxu0
    %v859 = vadd.f32 %v762, %v858
    %v860 = vpop.f32.mrf.mxu0
    %v861 = vpop.f32.mrf.mxu0
    %v862 = vadd.f32 %v765, %v861
    %v863 = vpop.f32.mrf.mxu0
    %864 = vmatprep.mubr.bf16.mxu0 0
    %865 = vmatmul.mubr.bf16.gmra.mxu0 %v540
    %v866 = vpop.f32.mrf.mxu0
    %v867 = vadd.f32 %v770, %v866
    %v868 = vpop.f32.mrf.mxu0
    %v869 = vpop.f32.mrf.mxu0
    %v870 = vadd.f32 %v773, %v869
    %v871 = vpop.f32.mrf.mxu0
    %872 = vmatprep.mubr.bf16.mxu0 0
    %873 = vmatmul.mubr.bf16.gmra.mxu0 %v543
    %v874 = vpop.f32.mrf.mxu0
    %v875 = vadd.f32 %v778, %v874
    %v876 = vpop.f32.mrf.mxu0
    %v877 = vpop.f32.mrf.mxu0
    %v878 = vadd.f32 %v781, %v877
    %v879 = vpop.f32.mrf.mxu0
    %880 = vmatprep.mubr.bf16.mxu0 0
    %881 = vmatmul.mubr.bf16.gmra.mxu0 %v546
    %v882 = vpop.f32.mrf.mxu0
    %v883 = vadd.f32 %v786, %v882
    %v884 = vpop.f32.mrf.mxu0
    %v885 = vpop.f32.mrf.mxu0
    %v886 = vadd.f32 %v789, %v885
    %v887 = vpop.f32.mrf.mxu0
    %888 = vdwg.mxu0
    %vm889 = vcmp.ge.f32.partialorder %v827, 0.0
    %vm890 = vcmp.ge.f32.partialorder %v830, 0.0
    %vm891 = vcmp.ge.f32.partialorder %v835, 0.0
    %vm892 = vcmp.ge.f32.partialorder %v838, 0.0
    %vm893 = vcmp.ge.f32.partialorder %v843, 0.0
    %vm894 = vcmp.ge.f32.partialorder %v846, 0.0
    %vm895 = vcmp.ge.f32.partialorder %v851, 0.0
    %vm896 = vcmp.ge.f32.partialorder %v854, 0.0
    %vm897 = vcmp.ge.f32.partialorder %v859, 0.0
    %vm898 = vcmp.ge.f32.partialorder %v862, 0.0
    %vm899 = vcmp.ge.f32.partialorder %v867, 0.0
    %vm900 = vcmp.ge.f32.partialorder %v870, 0.0
    %vm901 = vcmp.ge.f32.partialorder %v875, 0.0
    %vm902 = vcmp.ge.f32.partialorder %v878, 0.0
    %vm903 = vcmp.ge.f32.partialorder %v883, 0.0
    %vm904 = vcmp.ge.f32.partialorder %v886, 0.0
    %v905 = vlaneseq
    %v906 = vshrl.u32 %v905, 7
    %v907 = vsub.s32 2, %v906
    %v908 = vrot.slane %v71, %v907
    %v909 = vmul.f32 %v908, %v827
    %v910 = vmul.f32 %v908, %v830
    %v911 = vmul.f32 %v908, %v835
    %v912 = vmul.f32 %v908, %v838
    %v913 = vmul.f32 %v908, %v843
    %v914 = vmul.f32 %v908, %v846
    %v915 = vmul.f32 %v908, %v851
    %v916 = vmul.f32 %v908, %v854
    %v917 = vmul.f32 %v908, %v859
    %v918 = vmul.f32 %v908, %v862
    %v919 = vmul.f32 %v908, %v867
    %v920 = vmul.f32 %v908, %v870
    %v921 = vmul.f32 %v908, %v875
    %v922 = vmul.f32 %v908, %v878
    %v923 = vmul.f32 %v908, %v883
    %v924 = vmul.f32 %v908, %v886
    %v925 = vsel %vm889, %v827, %v909
    %v926 = vsel %vm890, %v830, %v910
    %v927 = vsel %vm891, %v835, %v911
    %v928 = vsel %vm892, %v838, %v912
    %v929 = vsel %vm893, %v843, %v913
    %v930 = vsel %vm894, %v846, %v914
    %v931 = vsel %vm895, %v851, %v915
    %v932 = vsel %vm896, %v854, %v916
    %v933 = vsel %vm897, %v859, %v917
    %v934 = vsel %vm898, %v862, %v918
    %v935 = vsel %vm899, %v867, %v919
    %v936 = vsel %vm900, %v870, %v920
    %v937 = vsel %vm901, %v875, %v921
    %v938 = vsel %vm902, %v878, %v922
    %v939 = vsel %vm903, %v883, %v923
    %v940 = vsel %vm904, %v886, %v924
    %s941 = scalar_lea.vmem [#allocation5], 192
    %v942 = vld [vmem:[%s941] sm:$0xf]
    %v943 = vld [vmem:[%s941 + $0x4] sm:$0xf]
    %v944 = vld [vmem:[%s941 + $0x8] sm:$0xf]
    %v945 = vld [vmem:[%s941 + $0xc] sm:$0xf]
    %v946 = vld [vmem:[%s941 + $0x10] sm:$0xf]
    %v947 = vld [vmem:[%s941 + $0x14] sm:$0xf]
    %v948 = vld [vmem:[%s941 + $0x18] sm:$0xf]
    %v949 = vld [vmem:[%s941 + $0x1c] sm:$0xf]
    %v950 = vld [vmem:[%s941 + $0x20] sm:$0xf]
    %v951 = vld [vmem:[%s941 + $0x24] sm:$0xf]
    %v952 = vld [vmem:[%s941 + $0x28] sm:$0xf]
    %v953 = vld [vmem:[%s941 + $0x2c] sm:$0xf]
    %v954 = vld [vmem:[%s941 + $0x30] sm:$0xf]
    %v955 = vld [vmem:[%s941 + $0x34] sm:$0xf]
    %v956 = vld [vmem:[%s941 + $0x38] sm:$0xf]
    %v957 = vld [vmem:[%s941 + $0x3c] sm:$0xf]
    %v958 = vld [vmem:[%s941 + $0x40] sm:$0xf]
    %v959 = vld [vmem:[%s941 + $0x44] sm:$0xf]
    %v960 = vld [vmem:[%s941 + $0x48] sm:$0xf]
    %v961 = vld [vmem:[%s941 + $0x4c] sm:$0xf]
    %v962 = vld [vmem:[%s941 + $0x50] sm:$0xf]
    %v963 = vld [vmem:[%s941 + $0x54] sm:$0xf]
    %v964 = vld [vmem:[%s941 + $0x58] sm:$0xf]
    %v965 = vld [vmem:[%s941 + $0x5c] sm:$0xf]
    %v966 = vld [vmem:[%s941 + $0x60] sm:$0xf]
    %v967 = vld [vmem:[%s941 + $0x64] sm:$0xf]
    %v968 = vld [vmem:[%s941 + $0x68] sm:$0xf]
    %v969 = vld [vmem:[%s941 + $0x6c] sm:$0xf]
    %v970 = vld [vmem:[%s941 + $0x70] sm:$0xf]
    %v971 = vld [vmem:[%s941 + $0x74] sm:$0xf]
    %v972 = vld [vmem:[%s941 + $0x78] sm:$0xf]
    %v973 = vld [vmem:[%s941 + $0x7c] sm:$0xf]
    %v974 = vld [vmem:[%s941 + $0x80] sm:$0xf]
    %v975 = vld [vmem:[%s941 + $0x84] sm:$0xf]
    %v976 = vld [vmem:[%s941 + $0x88] sm:$0xf]
    %v977 = vld [vmem:[%s941 + $0x8c] sm:$0xf]
    %v978 = vld [vmem:[%s941 + $0x90] sm:$0xf]
    %v979 = vld [vmem:[%s941 + $0x94] sm:$0xf]
    %v980 = vld [vmem:[%s941 + $0x98] sm:$0xf]
    %v981 = vld [vmem:[%s941 + $0x9c] sm:$0xf]
    %v982 = vld [vmem:[%s941 + $0xa0] sm:$0xf]
    %v983 = vld [vmem:[%s941 + $0xa4] sm:$0xf]
    %v984 = vld [vmem:[%s941 + $0xa8] sm:$0xf]
    %v985 = vld [vmem:[%s941 + $0xac] sm:$0xf]
    %v986 = vld [vmem:[%s941 + $0xb0] sm:$0xf]
    %v987 = vld [vmem:[%s941 + $0xb4] sm:$0xf]
    %v988 = vld [vmem:[%s941 + $0xb8] sm:$0xf]
    %v989 = vld [vmem:[%s941 + $0xbc] sm:$0xf]
    %v990 = vrot.slane %v925, 7
    %v991 = vrot.slane %v926, 7
    %v992 = vrot.slane %v927, 7
    %v993 = vrot.slane %v928, 7
    %v994 = vrot.slane %v929, 7
    %v995 = vrot.slane %v930, 7
    %v996 = vrot.slane %v931, 7
    %v997 = vrot.slane %v932, 7
    %v998 = vrot.slane %v933, 7
    %v999 = vrot.slane %v934, 7
    %v1000 = vrot.slane %v935, 7
    %v1001 = vrot.slane %v936, 7
    %v1002 = vrot.slane %v937, 7
    %v1003 = vrot.slane %v938, 7
    %v1004 = vrot.slane %v939, 7
    %v1005 = vrot.slane %v940, 7
    %v1006 = vsel %vm441, %v1004, %v1005
    %v1007 = vsel %vm441, %v1003, %v1004
    %v1008 = vsel %vm441, %v1002, %v1003
    %v1009 = vsel %vm441, %v1001, %v1002
    %v1010 = vsel %vm441, %v1000, %v1001
    %v1011 = vsel %vm441, %v999, %v1000
    %v1012 = vsel %vm441, %v998, %v999
    %v1013 = vsel %vm441, %v997, %v998
    %v1014 = vsel %vm441, %v996, %v997
    %v1015 = vsel %vm441, %v995, %v996
    %v1016 = vsel %vm441, %v994, %v995
    %v1017 = vsel %vm441, %v993, %v994
    %v1018 = vsel %vm441, %v992, %v993
    %v1019 = vsel %vm441, %v991, %v992
    %v1020 = vsel %vm441, %v990, %v991
    %v1021 = vsel %vm441, %v1005, %v990
    %v1022 = vmul.f32 %v1021, %v313
    %v1023 = vmul.f32 %v1020, %v314
    %v1024 = vmul.f32 %v1019, %v315
    %v1025 = vmul.f32 %v1018, %v316
    %v1026 = vmul.f32 %v1017, %v317
    %v1027 = vmul.f32 %v1016, %v318
    %v1028 = vmul.f32 %v1015, %v319
    %v1029 = vmul.f32 %v1014, %v320
    %v1030 = vmul.f32 %v1013, %v321
    %v1031 = vmul.f32 %v1012, %v322
    %v1032 = vmul.f32 %v1011, %v323
    %v1033 = vmul.f32 %v1010, %v324
    %v1034 = vmul.f32 %v1009, %v325
    %v1035 = vmul.f32 %v1008, %v326
    %v1036 = vmul.f32 %v1007, %v327
    %v1037 = vmul.f32 %v1006, %v328
    %v1038 = vrot.slane %v925, 1
    %v1039 = vrot.slane %v926, 1
    %v1040 = vrot.slane %v927, 1
    %v1041 = vrot.slane %v928, 1
    %v1042 = vrot.slane %v929, 1
    %v1043 = vrot.slane %v930, 1
    %v1044 = vrot.slane %v931, 1
    %v1045 = vrot.slane %v932, 1
    %v1046 = vrot.slane %v933, 1
    %v1047 = vrot.slane %v934, 1
    %v1048 = vrot.slane %v935, 1
    %v1049 = vrot.slane %v936, 1
    %v1050 = vrot.slane %v937, 1
    %v1051 = vrot.slane %v938, 1
    %v1052 = vrot.slane %v939, 1
    %v1053 = vrot.slane %v940, 1
    %v1054 = vsel %vm490, %v1052, %v1053
    %v1055 = vsel %vm490, %v1051, %v1052
    %v1056 = vsel %vm490, %v1050, %v1051
    %v1057 = vsel %vm490, %v1049, %v1050
    %v1058 = vsel %vm490, %v1048, %v1049
    %v1059 = vsel %vm490, %v1047, %v1048
    %v1060 = vsel %vm490, %v1046, %v1047
    %v1061 = vsel %vm490, %v1045, %v1046
    %v1062 = vsel %vm490, %v1044, %v1045
    %v1063 = vsel %vm490, %v1043, %v1044
    %v1064 = vsel %vm490, %v1042, %v1043
    %v1065 = vsel %vm490, %v1041, %v1042
    %v1066 = vsel %vm490, %v1040, %v1041
    %v1067 = vsel %vm490, %v1039, %v1040
    %v1068 = vsel %vm490, %v1038, %v1039
    %v1069 = vsel %vm490, %v1053, %v1038
    %v1070 = vmul.f32 %v1068, %v361
    %v1071 = vmul.f32 %v1067, %v362
    %v1072 = vmul.f32 %v1066, %v363
    %v1073 = vmul.f32 %v1065, %v364
    %v1074 = vmul.f32 %v1064, %v365
    %v1075 = vmul.f32 %v1063, %v366
    %v1076 = vmul.f32 %v1062, %v367
    %v1077 = vmul.f32 %v1061, %v368
    %v1078 = vmul.f32 %v1060, %v369
    %v1079 = vmul.f32 %v1059, %v370
    %v1080 = vmul.f32 %v1058, %v371
    %v1081 = vmul.f32 %v1057, %v372
    %v1082 = vmul.f32 %v1056, %v373
    %v1083 = vmul.f32 %v1055, %v374
    %v1084 = vmul.f32 %v1054, %v375
    %v1085 = vmul.f32 %v1069, %v376
    %v1086 = vpack.c.bf16 %v1023, %v1022
    %v1087 = vpack.c.bf16 %v926, %v925
    %v1088 = vpack.c.bf16 %v1071, %v1070
    %v1089 = vpack.c.bf16 %v1025, %v1024
    %v1090 = vpack.c.bf16 %v928, %v927
    %v1091 = vpack.c.bf16 %v1073, %v1072
    %v1092 = vpack.c.bf16 %v1027, %v1026
    %v1093 = vpack.c.bf16 %v930, %v929
    %v1094 = vpack.c.bf16 %v1075, %v1074
    %v1095 = vpack.c.bf16 %v1029, %v1028
    %v1096 = vpack.c.bf16 %v932, %v931
    %v1097 = vpack.c.bf16 %v1077, %v1076
    %v1098 = vpack.c.bf16 %v1031, %v1030
    %v1099 = vpack.c.bf16 %v934, %v933
    %v1100 = vpack.c.bf16 %v1079, %v1078
    %v1101 = vpack.c.bf16 %v1033, %v1032
    %v1102 = vpack.c.bf16 %v936, %v935
    %v1103 = vpack.c.bf16 %v1081, %v1080
    %v1104 = vpack.c.bf16 %v1035, %v1034
    %v1105 = vpack.c.bf16 %v938, %v937
    %v1106 = vpack.c.bf16 %v1083, %v1082
    %v1107 = vpack.c.bf16 %v1037, %v1036
    %v1108 = vpack.c.bf16 %v940, %v939
    %v1109 = vpack.c.bf16 %v1085, %v1084
    %v1110 = vlaneseq
    %v1111 = vshrl.u32 %v1110, 7
    %v1112 = vsub.s32 1, %v1111
    %v1113 = vrot.slane %v71, %v1112
    %v1162 = vunpack.c.l.b16 %v942
    %v1163 = vunpack.c.l.b16 %v943
    %v1164 = vunpack.c.l.b16 %v944
    %v1165 = vunpack.c.l.b16 %v945
    %v1166 = vunpack.c.l.b16 %v946
    %v1167 = vunpack.c.l.b16 %v947
    %v1168 = vunpack.c.l.b16 %v948
    %v1169 = vunpack.c.l.b16 %v949
    %v1170 = vunpack.c.l.b16 %v950
    %v1171 = vunpack.c.l.b16 %v951
    %v1172 = vunpack.c.l.b16 %v952
    %v1173 = vunpack.c.l.b16 %v953
    %v1174 = vunpack.c.l.b16 %v954
    %v1175 = vunpack.c.l.b16 %v955
    %v1176 = vunpack.c.l.b16 %v956
    %v1177 = vunpack.c.l.b16 %v957
    %v1178 = vunpack.c.l.b16 %v958
    %v1179 = vunpack.c.l.b16 %v959
    %v1180 = vunpack.c.l.b16 %v960
    %v1181 = vunpack.c.l.b16 %v961
    %v1182 = vunpack.c.l.b16 %v962
    %v1183 = vunpack.c.l.b16 %v963
    %v1184 = vunpack.c.l.b16 %v964
    %v1185 = vunpack.c.l.b16 %v965
    %v1186 = vunpack.c.l.b16 %v966
    %v1187 = vunpack.c.l.b16 %v967
    %v1188 = vunpack.c.l.b16 %v968
    %v1189 = vunpack.c.l.b16 %v969
    %v1190 = vunpack.c.l.b16 %v970
    %v1191 = vunpack.c.l.b16 %v971
    %v1192 = vunpack.c.l.b16 %v972
    %v1193 = vunpack.c.l.b16 %v973
    %v1194 = vunpack.c.l.b16 %v974
    %v1195 = vunpack.c.l.b16 %v975
    %v1196 = vunpack.c.l.b16 %v976
    %v1197 = vunpack.c.l.b16 %v977
    %v1198 = vunpack.c.l.b16 %v978
    %v1199 = vunpack.c.l.b16 %v979
    %v1200 = vunpack.c.l.b16 %v980
    %v1201 = vunpack.c.l.b16 %v981
    %v1202 = vunpack.c.l.b16 %v982
    %v1203 = vunpack.c.l.b16 %v983
    %v1204 = vunpack.c.l.b16 %v984
    %v1205 = vunpack.c.l.b16 %v985
    %v1206 = vunpack.c.l.b16 %v986
    %v1207 = vunpack.c.l.b16 %v987
    %v1208 = vunpack.c.l.b16 %v988
    %v1209 = vunpack.c.l.b16 %v989
    %v1210 = vpack.c.b16 %v1163, %v1162
    %v1211 = vpack.c.b16 %v1165, %v1164
    %v1212 = vpack.c.b16 %v1167, %v1166
    %v1213 = vpack.c.b16 %v1169, %v1168
    %v1214 = vpack.c.b16 %v1171, %v1170
    %v1215 = vpack.c.b16 %v1173, %v1172
    %v1216 = vpack.c.b16 %v1175, %v1174
    %v1217 = vpack.c.b16 %v1177, %v1176
    %v1218 = vpack.c.b16 %v1179, %v1178
    %v1219 = vpack.c.b16 %v1181, %v1180
    %v1220 = vpack.c.b16 %v1183, %v1182
    %v1221 = vpack.c.b16 %v1185, %v1184
    %v1222 = vpack.c.b16 %v1187, %v1186
    %v1223 = vpack.c.b16 %v1189, %v1188
    %v1224 = vpack.c.b16 %v1191, %v1190
    %v1225 = vpack.c.b16 %v1193, %v1192
    %v1226 = vpack.c.b16 %v1195, %v1194
    %v1227 = vpack.c.b16 %v1197, %v1196
    %v1228 = vpack.c.b16 %v1199, %v1198
    %v1229 = vpack.c.b16 %v1201, %v1200
    %v1230 = vpack.c.b16 %v1203, %v1202
    %v1231 = vpack.c.b16 %v1205, %v1204
    %v1232 = vpack.c.b16 %v1207, %v1206
    %v1233 = vpack.c.b16 %v1209, %v1208
    %1258 = vmatprep.subr.bf16.mxu0 0
    %1259 = vmatpush1.bf16.msra.mxu0 %v1217
    %1260 = vmatprep.subr.bf16.mxu0 0
    %1261 = vmatpush1.bf16.msra.mxu0 %v1216
    %1262 = vmatprep.subr.bf16.mxu0 0
    %1263 = vmatpush1.bf16.msra.mxu0 %v1215
    %1264 = vmatprep.subr.bf16.mxu0 0
    %1265 = vmatpush1.bf16.msra.mxu0 %v1214
    %1266 = vmatprep.subr.bf16.mxu0 0
    %1267 = vmatpush1.bf16.msra.mxu0 %v1213
    %1268 = vmatprep.subr.bf16.mxu0 0
    %1269 = vmatpush1.bf16.msra.mxu0 %v1212
    %1270 = vmatprep.subr.bf16.mxu0 0
    %1271 = vmatpush1.bf16.msra.mxu0 %v1211
    %1272 = vmatprep.subr.bf16.mxu0 0
    %1273 = vmatpush1.bf16.msra.mxu0 %v1210
    %1274 = vmatprep.subr.bf16.mxu0 0
    %1275 = vmatpush2.bf16.msra.mxu0 %v1225
    %1276 = vmatprep.subr.bf16.mxu0 0
    %1277 = vmatpush2.bf16.msra.mxu0 %v1224
    %1278 = vmatprep.subr.bf16.mxu0 0
    %1279 = vmatpush2.bf16.msra.mxu0 %v1223
    %1280 = vmatprep.subr.bf16.mxu0 0
    %1281 = vmatpush2.bf16.msra.mxu0 %v1222
    %1282 = vmatprep.subr.bf16.mxu0 0
    %1283 = vmatpush2.bf16.msra.mxu0 %v1221
    %1284 = vmatprep.subr.bf16.mxu0 0
    %1285 = vmatpush2.bf16.msra.mxu0 %v1220
    %1286 = vmatprep.subr.bf16.mxu0 0
    %1287 = vmatpush2.bf16.msra.mxu0 %v1219
    %1288 = vmatprep.subr.bf16.mxu0 0
    %1289 = vmatpush2.bf16.msra.mxu0 %v1218
    %1290 = vmatprep.mubr.bf16.mxu0 %v1087
    %1291 = vmatmul.mubr.bf16.gmra.mxu0 %v1086
    %v1292 = vpop.f32.mrf.mxu0
    %v1293 = vadd.f32 %v1113, %v1292
    %v1294 = vpop.f32.mrf.mxu0
    %v1295 = vpop.f32.mrf.mxu0
    %v1296 = vadd.f32 %v1113, %v1295
    %v1297 = vpop.f32.mrf.mxu0
    %1298 = vmatprep.mubr.bf16.mxu0 %v1090
    %1299 = vmatmul.mubr.bf16.gmra.mxu0 %v1089
    %v1300 = vpop.f32.mrf.mxu0
    %v1301 = vadd.f32 %v1113, %v1300
    %v1302 = vpop.f32.mrf.mxu0
    %v1303 = vpop.f32.mrf.mxu0
    %v1304 = vadd.f32 %v1113, %v1303
    %v1305 = vpop.f32.mrf.mxu0
    %1306 = vmatprep.mubr.bf16.mxu0 %v1093
    %1307 = vmatmul.mubr.bf16.gmra.mxu0 %v1092
    %v1308 = vpop.f32.mrf.mxu0
    %v1309 = vadd.f32 %v1113, %v1308
    %v1310 = vpop.f32.mrf.mxu0
    %v1311 = vpop.f32.mrf.mxu0
    %v1312 = vadd.f32 %v1113, %v1311
    %v1313 = vpop.f32.mrf.mxu0
    %1314 = vmatprep.mubr.bf16.mxu0 %v1096
    %1315 = vmatmul.mubr.bf16.gmra.mxu0 %v1095
    %v1316 = vpop.f32.mrf.mxu0
    %v1317 = vadd.f32 %v1113, %v1316
    %v1318 = vpop.f32.mrf.mxu0
    %v1319 = vpop.f32.mrf.mxu0
    %v1320 = vadd.f32 %v1113, %v1319
    %v1321 = vpop.f32.mrf.mxu0
    %1322 = vmatprep.mubr.bf16.mxu0 %v1099
    %1323 = vmatmul.mubr.bf16.gmra.mxu0 %v1098
    %v1324 = vpop.f32.mrf.mxu0
    %v1325 = vadd.f32 %v1113, %v1324
    %v1326 = vpop.f32.mrf.mxu0
    %v1327 = vpop.f32.mrf.mxu0
    %v1328 = vadd.f32 %v1113, %v1327
    %v1329 = vpop.f32.mrf.mxu0
    %1330 = vmatprep.mubr.bf16.mxu0 %v1102
    %1331 = vmatmul.mubr.bf16.gmra.mxu0 %v1101
    %v1332 = vpop.f32.mrf.mxu0
    %v1333 = vadd.f32 %v1113, %v1332
    %v1334 = vpop.f32.mrf.mxu0
    %v1335 = vpop.f32.mrf.mxu0
    %v1336 = vadd.f32 %v1113, %v1335
    %v1337 = vpop.f32.mrf.mxu0
    %1338 = vmatprep.mubr.bf16.mxu0 %v1105
    %1339 = vmatmul.mubr.bf16.gmra.mxu0 %v1104
    %v1340 = vpop.f32.mrf.mxu0
    %v1341 = vadd.f32 %v1113, %v1340
    %v1342 = vpop.f32.mrf.mxu0
    %v1343 = vpop.f32.mrf.mxu0
    %v1344 = vadd.f32 %v1113, %v1343
    %v1345 = vpop.f32.mrf.mxu0
    %1346 = vmatprep.mubr.bf16.mxu0 %v1108
    %1347 = vmatmul.mubr.bf16.gmra.mxu0 %v1107
    %v1348 = vpop.f32.mrf.mxu0
    %v1349 = vadd.f32 %v1113, %v1348
    %v1350 = vpop.f32.mrf.mxu0
    %v1351 = vpop.f32.mrf.mxu0
    %v1352 = vadd.f32 %v1113, %v1351
    %v1353 = vpop.f32.mrf.mxu0
    %1354 = vdwg.mxu0
    %1355 = vmatprep.subr.bf16.mxu0 0
    %1356 = vmatpush1.bf16.msra.mxu0 %v1233
    %1357 = vmatprep.subr.bf16.mxu0 0
    %1358 = vmatpush1.bf16.msra.mxu0 %v1232
    %1359 = vmatprep.subr.bf16.mxu0 0
    %1360 = vmatpush1.bf16.msra.mxu0 %v1231
    %1361 = vmatprep.subr.bf16.mxu0 0
    %1362 = vmatpush1.bf16.msra.mxu0 %v1230
    %1363 = vmatprep.subr.bf16.mxu0 0
    %1364 = vmatpush1.bf16.msra.mxu0 %v1229
    %1365 = vmatprep.subr.bf16.mxu0 0
    %1366 = vmatpush1.bf16.msra.mxu0 %v1228
    %1367 = vmatprep.subr.bf16.mxu0 0
    %1368 = vmatpush1.bf16.msra.mxu0 %v1227
    %1369 = vmatprep.subr.bf16.mxu0 0
    %1370 = vmatpush1.bf16.msra.mxu0 %v1226
    %1371 = vmatprep.subr.bf16.mxu0 0
    %1372 = vmatpush2.bf16.msra.mxu0 0
    %1373 = vmatprep.subr.bf16.mxu0 0
    %1374 = vmatpush2.bf16.msra.mxu0 0
    %1375 = vmatprep.subr.bf16.mxu0 0
    %1376 = vmatpush2.bf16.msra.mxu0 0
    %1377 = vmatprep.subr.bf16.mxu0 0
    %1378 = vmatpush2.bf16.msra.mxu0 0
    %1379 = vmatprep.subr.bf16.mxu0 0
    %1380 = vmatpush2.bf16.msra.mxu0 0
    %1381 = vmatprep.subr.bf16.mxu0 0
    %1382 = vmatpush2.bf16.msra.mxu0 0
    %1383 = vmatprep.subr.bf16.mxu0 0
    %1384 = vmatpush2.bf16.msra.mxu0 0
    %1385 = vmatprep.subr.bf16.mxu0 0
    %1386 = vmatpush2.bf16.msra.mxu0 0
    %1387 = vmatprep.mubr.bf16.mxu0 0
    %1388 = vmatmul.mubr.bf16.gmra.mxu0 %v1088
    %v1389 = vpop.f32.mrf.mxu0
    %v1390 = vadd.f32 %v1293, %v1389
    %v1391 = vpop.f32.mrf.mxu0
    %v1392 = vpop.f32.mrf.mxu0
    %v1393 = vadd.f32 %v1296, %v1392
    %v1394 = vpop.f32.mrf.mxu0
    %1395 = vmatprep.mubr.bf16.mxu0 0
    %1396 = vmatmul.mubr.bf16.gmra.mxu0 %v1091
    %v1397 = vpop.f32.mrf.mxu0
    %v1398 = vadd.f32 %v1301, %v1397
    %v1399 = vpop.f32.mrf.mxu0
    %v1400 = vpop.f32.mrf.mxu0
    %v1401 = vadd.f32 %v1304, %v1400
    %v1402 = vpop.f32.mrf.mxu0
    %1403 = vmatprep.mubr.bf16.mxu0 0
    %1404 = vmatmul.mubr.bf16.gmra.mxu0 %v1094
    %v1405 = vpop.f32.mrf.mxu0
    %v1406 = vadd.f32 %v1309, %v1405
    %v1407 = vpop.f32.mrf.mxu0
    %v1408 = vpop.f32.mrf.mxu0
    %v1409 = vadd.f32 %v1312, %v1408
    %v1410 = vpop.f32.mrf.mxu0
    %1411 = vmatprep.mubr.bf16.mxu0 0
    %1412 = vmatmul.mubr.bf16.gmra.mxu0 %v1097
    %v1413 = vpop.f32.mrf.mxu0
    %v1414 = vadd.f32 %v1317, %v1413
    %v1415 = vpop.f32.mrf.mxu0
    %v1416 = vpop.f32.mrf.mxu0
    %v1417 = vadd.f32 %v1320, %v1416
    %v1418 = vpop.f32.mrf.mxu0
    %1419 = vmatprep.mubr.bf16.mxu0 0
    %1420 = vmatmul.mubr.bf16.gmra.mxu0 %v1100
    %v1421 = vpop.f32.mrf.mxu0
    %v1422 = vadd.f32 %v1325, %v1421
    %v1423 = vpop.f32.mrf.mxu0
    %v1424 = vpop.f32.mrf.mxu0
    %v1425 = vadd.f32 %v1328, %v1424
    %v1426 = vpop.f32.mrf.mxu0
    %1427 = vmatprep.mubr.bf16.mxu0 0
    %1428 = vmatmul.mubr.bf16.gmra.mxu0 %v1103
    %v1429 = vpop.f32.mrf.mxu0
    %v1430 = vadd.f32 %v1333, %v1429
    %v1431 = vpop.f32.mrf.mxu0
    %v1432 = vpop.f32.mrf.mxu0
    %v1433 = vadd.f32 %v1336, %v1432
    %v1434 = vpop.f32.mrf.mxu0
    %1435 = vmatprep.mubr.bf16.mxu0 0
    %1436 = vmatmul.mubr.bf16.gmra.mxu0 %v1106
    %v1437 = vpop.f32.mrf.mxu0
    %v1438 = vadd.f32 %v1341, %v1437
    %v1439 = vpop.f32.mrf.mxu0
    %v1440 = vpop.f32.mrf.mxu0
    %v1441 = vadd.f32 %v1344, %v1440
    %v1442 = vpop.f32.mrf.mxu0
    %1443 = vmatprep.mubr.bf16.mxu0 0
    %1444 = vmatmul.mubr.bf16.gmra.mxu0 %v1109
    %v1445 = vpop.f32.mrf.mxu0
    %v1446 = vadd.f32 %v1349, %v1445
    %v1447 = vpop.f32.mrf.mxu0
    %v1448 = vpop.f32.mrf.mxu0
    %v1449 = vadd.f32 %v1352, %v1448
    %v1450 = vpop.f32.mrf.mxu0
    %1451 = vdwg.mxu0
    %v1452 = vadd.f32 %v55, %v1390
    %v1453 = vadd.f32 %v56, %v1393
    %v1454 = vadd.f32 %v57, %v1398
    %v1455 = vadd.f32 %v58, %v1401
    %v1456 = vadd.f32 %v59, %v1406
    %v1457 = vadd.f32 %v60, %v1409
    %v1458 = vadd.f32 %v61, %v1414
    %v1459 = vadd.f32 %v62, %v1417
    %v1460 = vadd.f32 %v63, %v1422
    %v1461 = vadd.f32 %v64, %v1425
    %v1462 = vadd.f32 %v65, %v1430
    %v1463 = vadd.f32 %v66, %v1433
    %v1464 = vadd.f32 %v67, %v1438
    %v1465 = vadd.f32 %v68, %v1441
    %v1466 = vadd.f32 %v69, %v1446
    %v1467 = vadd.f32 %v70, %v1449
    %1468 = vst [vmem:[#allocation8] sm:$0xff] %v1452
    %1469 = vst [vmem:[#allocation8 + $0x8] sm:$0xff] %v1453
    %1470 = vst [vmem:[#allocation8 + $0x10] sm:$0xff] %v1454
    %1471 = vst [vmem:[#allocation8 + $0x18] sm:$0xff] %v1455
    %1472 = vst [vmem:[#allocation8 + $0x20] sm:$0xff] %v1456
    %1473 = vst [vmem:[#allocation8 + $0x28] sm:$0xff] %v1457
    %1474 = vst [vmem:[#allocation8 + $0x30] sm:$0xff] %v1458
    %1475 = vst [vmem:[#allocation8 + $0x38] sm:$0xff] %v1459
    %1476 = vst [vmem:[#allocation8 + $0x40] sm:$0xff] %v1460
    %1477 = vst [vmem:[#allocation8 + $0x48] sm:$0xff] %v1461
    %1478 = vst [vmem:[#allocation8 + $0x50] sm:$0xff] %v1462
    %1479 = vst [vmem:[#allocation8 + $0x58] sm:$0xff] %v1463
    %1480 = vst [vmem:[#allocation8 + $0x60] sm:$0xff] %v1464
    %1481 = vst [vmem:[#allocation8 + $0x68] sm:$0xff] %v1465
    %1482 = vst [vmem:[#allocation8 + $0x70] sm:$0xff] %v1466
    %1483 = vst [vmem:[#allocation8 + $0x78] sm:$0xff] %v1467
    // Predicated region
    $region26: #{tpu_custom_call.1} parent=1 // pred_check
      _
    $region27: #{tpu_custom_call.1} parent=1 // pred_check_branch
      %1485 = sbr.rel (0) target = $region29
    $region28: #{tpu_custom_call.1} parent=1 // pred_region
      %s1487 = ssub.s32 2048, 2048
      %1488 = vsyncadd [#allocation4], %s1487
      %s1489 = sshll.u32 [#allocation8], 4
      %s1490 = int_to_ptr.vmem [resolvable:$true] %s1489
      %1495 = dma.vmem_to_hbm [thread:$0]  %s1490, 2048, %s3, [#allocation4], 128, 128, 8
    $region29: #{tpu_custom_call.1} parent=1 // pred_fallthru
      _
    // Predicated region
    $region30: #{tpu_custom_call.1} parent=1 // pred_check
      _
    $region31: #{tpu_custom_call.1} parent=1 // pred_check_branch
      %1497 = sbr.rel (0) target = $region33
    $region32: #{tpu_custom_call.1} parent=1 // pred_region
      %1498 = dma.done [#allocation4], 2048
    $region33: #{tpu_custom_call.1} parent=1 // pred_fallthru
      _
    %1499 = vsyncpa [#allocation3], 1
    %1500 = vsyncpa [#allocation6], 1
    %1501 = vsyncpa [#allocation4], 1

// kernel: tpu_custom_call.1
$region0: #{tpu_custom_call.1}
  #allocation0 [shape = 'u32[]', space=smem, size = 0x4, offset = 0x4, fixed_abs, tag = 'smem constant byte address 0x4 - core index']
  #allocation1 [shape = 'u32[144,128]{1,0:T(1,128)}', space=vmem, size = 0x12000, scoped, tag = 'internal scratch']
  %s0 = inlined_call_operand.hbm [shape: f32[8,16,128], index: 0, kind: input, shape index: {}]
  %s1 = inlined_call_operand.hbm [shape: bf16[2,384,128], index: 1, kind: input, shape index: {}]
  %s2 = inlined_call_operand.hbm [shape: f32[3,128], index: 2, kind: input, shape index: {}]
  %s3 = inlined_call_operand.hbm [shape: f32[8,16,128], index: 3, kind: output, shape index: {}]
  %s4 = sld [smem:[#allocation0]]
  $region34: #{tpu_custom_call.1} parent=0
    _
  %s6 = ssub.s32 1, %s4
  %s7 = scalar_select 0, %s6, %s4
  $region1: #{tpu_custom_call.1} parent=0
    #allocation2 [shape = 'u8[65536]{0}', space=vmem, size = 0x10000, scoped, tag = 'input window, operand 0, single buffered']
    #allocation3 [shape = 's32[1]{0}', space=sflag, size = 0x4, scoped, tag = 'scoped memory for tpu_custom_call.1']
    #allocation4 [shape = 's32[1]{0}', space=sflag, size = 0x4, scoped, tag = 'scoped memory for tpu_custom_call.1']
    #allocation5 [shape = 'u8[196608]{0}', space=vmem, size = 0x30000, scoped, tag = 'input window, operand 1, single buffered']
    #allocation6 [shape = 's32[1]{0}', space=sflag, size = 0x4, scoped, tag = 'scoped memory for tpu_custom_call.1']
    #allocation7 [shape = 'u8[2048]{0}', space=vmem, size = 0x800, scoped, tag = 'input window, operand 2, single buffered']
    #allocation8 [shape = 'u8[65536]{0}', space=vmem, size = 0x10000, scoped, tag = 'output window, operand 0, single buffered']
    %8 = vsyncpa [#allocation3], 0
    %9 = vsyncpa [#allocation6], 0
    %10 = vsyncpa [#allocation4], 0
    // Predicated region
    $region2: #{tpu_custom_call.1} parent=1 // pred_check
      _
    $region3: #{tpu_custom_call.1} parent=1 // pred_check_branch
      %12 = sbr.rel (0) target = $region5
    $region4: #{tpu_custom_call.1} parent=1 // pred_region
      %s14 = ssub.s32 2048, 2048
      %15 = vsyncadd [#allocation3], %s14
      %s16 = sshll.u32 [#allocation2], 4
      %s17 = int_to_ptr.vmem [resolvable:$true] %s16
      %22 = dma.hbm_to_vmem [thread:$0]  %s0, 2048, %s17, [#allocation3], 128, 128, 8
    $region5: #{tpu_custom_call.1} parent=1 // pred_fallthru
      _
    // Predicated region
    $region6: #{tpu_custom_call.1} parent=1 // pred_check
      _
    $region7: #{tpu_custom_call.1} parent=1 // pred_check_branch
      %24 = sbr.rel (0) target = $region9
    $region8: #{tpu_custom_call.1} parent=1 // pred_region
      %s26 = ssub.s32 6144, 6144
      %27 = vsyncadd [#allocation6], %s26
      %s28 = sshll.u32 [#allocation5], 4
      %s29 = int_to_ptr.vmem [resolvable:$true] %s28
      %34 = dma.hbm_to_vmem [thread:$0]  %s1, 6144, %s29, [#allocation6], 64, 64, 4
    $region9: #{tpu_custom_call.1} parent=1 // pred_fallthru
      _
    // Predicated region
    $region10: #{tpu_custom_call.1} parent=1 // pred_check
      _
    $region11: #{tpu_custom_call.1} parent=1 // pred_check_branch
      %36 = sbr.rel (0) target = $region13
    $region12: #{tpu_custom_call.1} parent=1 // pred_region
      %s38 = ssub.s32 64, 64
      %39 = vsyncadd [#allocation6], %s38
      %s41 = sshll.u32 [#allocation7], 4
      %s42 = int_to_ptr.vmem [resolvable:$true] %s41
      %44 = dma.hbm_to_vmem [thread:$0]  %s2, 64, %s42, [#allocation6]
    $region13: #{tpu_custom_call.1} parent=1 // pred_fallthru
      _
    // Predicated region
    $region14: #{tpu_custom_call.1} parent=1 // pred_check
      _
    $region15: #{tpu_custom_call.1} parent=1 // pred_check_branch
      %46 = sbr.rel (0) target = $region17
    $region16: #{tpu_custom_call.1} parent=1 // pred_region
      %47 = dma.done [#allocation3], 2048
    $region17: #{tpu_custom_call.1} parent=1 // pred_fallthru
      _
    // Predicated region
    $region18: #{tpu_custom_call.1} parent=1 // pred_check
      _
    $region19: #{tpu_custom_call.1} parent=1 // pred_check_branch
      %49 = sbr.rel (0) target = $region21
    $region20: #{tpu_custom_call.1} parent=1 // pred_region
      %50 = dma.done [#allocation6], 6144
    $region21: #{tpu_custom_call.1} parent=1 // pred_fallthru
      _
    // Predicated region
    $region22: #{tpu_custom_call.1} parent=1 // pred_check
      _
    $region23: #{tpu_custom_call.1} parent=1 // pred_check_branch
      %52 = sbr.rel (0) target = $region25
    $region24: #{tpu_custom_call.1} parent=1 // pred_region
      %53 = dma.done [#allocation6], 64
    $region25: #{tpu_custom_call.1} parent=1 // pred_fallthru
      _
    %v55 = vld [vmem:[#allocation2] sm:$0xff]
    %v56 = vld [vmem:[#allocation2 + $0x8] sm:$0xff]
    %v57 = vld [vmem:[#allocation2 + $0x10] sm:$0xff]
    %v58 = vld [vmem:[#allocation2 + $0x18] sm:$0xff]
    %v59 = vld [vmem:[#allocation2 + $0x20] sm:$0xff]
    %v60 = vld [vmem:[#allocation2 + $0x28] sm:$0xff]
    %v61 = vld [vmem:[#allocation2 + $0x30] sm:$0xff]
    %v62 = vld [vmem:[#allocation2 + $0x38] sm:$0xff]
    %v63 = vld [vmem:[#allocation2 + $0x40] sm:$0xff]
    %v64 = vld [vmem:[#allocation2 + $0x48] sm:$0xff]
    %v65 = vld [vmem:[#allocation2 + $0x50] sm:$0xff]
    %v66 = vld [vmem:[#allocation2 + $0x58] sm:$0xff]
    %v67 = vld [vmem:[#allocation2 + $0x60] sm:$0xff]
    %v68 = vld [vmem:[#allocation2 + $0x68] sm:$0xff]
    %v69 = vld [vmem:[#allocation2 + $0x70] sm:$0xff]
    %v70 = vld [vmem:[#allocation2 + $0x78] sm:$0xff]
    %v71 = vld [vmem:[#allocation7] sm:$0x7]
    %v72 = vlaneseq
    %v73 = vshrl.u32 %v72, 7
    %v74 = vadd.s32 %v73, 8
    %v75 = vadd.s32 %v73, 16
    %v76 = vadd.s32 %v73, 24
    %v77 = vadd.s32 %v73, 32
    %v78 = vadd.s32 %v73, 40
    %v79 = vadd.s32 %v73, 48
    %v80 = vadd.s32 %v73, 56
    %v81 = vadd.s32 %v73, 64
    %v82 = vadd.s32 %v73, 72
    %v83 = vadd.s32 %v73, 80
    %v84 = vadd.s32 %v73, 88
    %v85 = vadd.s32 %v73, 96
    %v86 = vadd.s32 %v73, 104
    %v87 = vadd.s32 %v73, 112
    %v88 = vadd.s32 %v73, 120
    %vm89 = vcmp.lt.s32.totalorder %v73, 0
    %v90 = vsub.s32 0, %v73
    %v91 = vsel %vm89, %v90, %v73
    %v92 = vshrl.u32 %v91, 4
    %v93 = vand.u32 %v91, 15
    %v94 = vsub.s32 0, %v93
    %v95 = vsel %vm89, %v94, %v93
    %vm96 = vcmp.lt.s32.totalorder %v74, 0
    %v97 = vsub.s32 0, %v74
    %v98 = vsel %vm96, %v97, %v74
    %v99 = vshrl.u32 %v98, 4
    %v100 = vand.u32 %v98, 15
    %v101 = vsub.s32 0, %v100
    %v102 = vsel %vm96, %v101, %v100
    %vm103 = vcmp.lt.s32.totalorder %v75, 0
    %v104 = vsub.s32 0, %v75
    %v105 = vsel %vm103, %v104, %v75
    %v106 = vshrl.u32 %v105, 4
    %v107 = vand.u32 %v105, 15
    %v108 = vsub.s32 0, %v107
    %v109 = vsel %vm103, %v108, %v107
    %vm110 = vcmp.lt.s32.totalorder %v76, 0
    %v111 = vsub.s32 0, %v76
    %v112 = vsel %vm110, %v111, %v76
    %v113 = vshrl.u32 %v112, 4
    %v114 = vand.u32 %v112, 15
    %v115 = vsub.s32 0, %v114
    %v116 = vsel %vm110, %v115, %v114
    %vm117 = vcmp.lt.s32.totalorder %v77, 0
    %v118 = vsub.s32 0, %v77
    %v119 = vsel %vm117, %v118, %v77
    %v120 = vshrl.u32 %v119, 4
    %v121 = vand.u32 %v119, 15
    %v122 = vsub.s32 0, %v121
    %v123 = vsel %vm117, %v122, %v121
    %vm124 = vcmp.lt.s32.totalorder %v78, 0
    %v125 = vsub.s32 0, %v78
    %v126 = vsel %vm124, %v125, %v78
    %v127 = vshrl.u32 %v126, 4
    %v128 = vand.u32 %v126, 15
    %v129 = vsub.s32 0, %v128
    %v130 = vsel %vm124, %v129, %v128
    %vm131 = vcmp.lt.s32.totalorder %v79, 0
    %v132 = vsub.s32 0, %v79
    %v133 = vsel %vm131, %v132, %v79
    %v134 = vshrl.u32 %v133, 4
    %v135 = vand.u32 %v133, 15
    %v136 = vsub.s32 0, %v135
    %v137 = vsel %vm131, %v136, %v135
    %vm138 = vcmp.lt.s32.totalorder %v80, 0
    %v139 = vsub.s32 0, %v80
    %v140 = vsel %vm138, %v139, %v80
    %v141 = vshrl.u32 %v140, 4
    %v142 = vand.u32 %v140, 15
    %v143 = vsub.s32 0, %v142
    %v144 = vsel %vm138, %v143, %v142
    %vm145 = vcmp.lt.s32.totalorder %v81, 0
    %v146 = vsub.s32 0, %v81
    %v147 = vsel %vm145, %v146, %v81
    %v148 = vshrl.u32 %v147, 4
    %v149 = vand.u32 %v147, 15
    %v150 = vsub.s32 0, %v149
    %v151 = vsel %vm145, %v150, %v149
    %vm152 = vcmp.lt.s32.totalorder %v82, 0
    %v153 = vsub.s32 0, %v82
    %v154 = vsel %vm152, %v153, %v82
    %v155 = vshrl.u32 %v154, 4
    %v156 = vand.u32 %v154, 15
    %v157 = vsub.s32 0, %v156
    %v158 = vsel %vm152, %v157, %v156
    %vm159 = vcmp.lt.s32.totalorder %v83, 0
    %v160 = vsub.s32 0, %v83
    %v161 = vsel %vm159, %v160, %v83
    %v162 = vshrl.u32 %v161, 4
    %v163 = vand.u32 %v161, 15
    %v164 = vsub.s32 0, %v163
    %v165 = vsel %vm159, %v164, %v163
    %vm166 = vcmp.lt.s32.totalorder %v84, 0
    %v167 = vsub.s32 0, %v84
    %v168 = vsel %vm166, %v167, %v84
    %v169 = vshrl.u32 %v168, 4
    %v170 = vand.u32 %v168, 15
    %v171 = vsub.s32 0, %v170
    %v172 = vsel %vm166, %v171, %v170
    %vm173 = vcmp.lt.s32.totalorder %v85, 0
    %v174 = vsub.s32 0, %v85
    %v175 = vsel %vm173, %v174, %v85
    %v176 = vshrl.u32 %v175, 4
    %v177 = vand.u32 %v175, 15
    %v178 = vsub.s32 0, %v177
    %v179 = vsel %vm173, %v178, %v177
    %vm180 = vcmp.lt.s32.totalorder %v86, 0
    %v181 = vsub.s32 0, %v86
    %v182 = vsel %vm180, %v181, %v86
    %v183 = vshrl.u32 %v182, 4
    %v184 = vand.u32 %v182, 15
    %v185 = vsub.s32 0, %v184
    %v186 = vsel %vm180, %v185, %v184
    %vm187 = vcmp.lt.s32.totalorder %v87, 0
    %v188 = vsub.s32 0, %v87
    %v189 = vsel %vm187, %v188, %v87
    %v190 = vshrl.u32 %v189, 4
    %v191 = vand.u32 %v189, 15
    %v192 = vsub.s32 0, %v191
    %v193 = vsel %vm187, %v192, %v191
    %vm194 = vcmp.lt.s32.totalorder %v88, 0
    %v195 = vsub.s32 0, %v88
    %v196 = vsel %vm194, %v195, %v88
    %v197 = vshrl.u32 %v196, 4
    %v198 = vand.u32 %v196, 15
    %v199 = vsub.s32 0, %v198
    %v200 = vsel %vm194, %v199, %v198
    %vm201 = vcmp.ne.s32.totalorder %v95, 0
    %vm202 = vcmp.ne.s32.totalorder %v102, 0
    %vm203 = vcmp.ne.s32.totalorder %v109, 0
    %vm204 = vcmp.ne.s32.totalorder %v116, 0
    %vm205 = vcmp.ne.s32.totalorder %v123, 0
    %vm206 = vcmp.ne.s32.totalorder %v130, 0
    %vm207 = vcmp.ne.s32.totalorder %v137, 0
    %vm208 = vcmp.ne.s32.totalorder %v144, 0
    %vm209 = vcmp.ne.s32.totalorder %v151, 0
    %vm210 = vcmp.ne.s32.totalorder %v158, 0
    %vm211 = vcmp.ne.s32.totalorder %v165, 0
    %vm212 = vcmp.ne.s32.totalorder %v172, 0
    %vm213 = vcmp.ne.s32.totalorder %v179, 0
    %vm214 = vcmp.ne.s32.totalorder %v186, 0
    %vm215 = vcmp.ne.s32.totalorder %v193, 0
    %vm216 = vcmp.ne.s32.totalorder %v200, 0
    %vm217 = vcmp.lt.s32.totalorder %v95, 0
    %vm218 = vcmp.lt.s32.totalorder %v102, 0
    %vm219 = vcmp.lt.s32.totalorder %v109, 0
    %vm220 = vcmp.lt.s32.totalorder %v116, 0
    %vm221 = vcmp.lt.s32.totalorder %v123, 0
    %vm222 = vcmp.lt.s32.totalorder %v130, 0
    %vm223 = vcmp.lt.s32.totalorder %v137, 0
    %vm224 = vcmp.lt.s32.totalorder %v144, 0
    %vm225 = vcmp.lt.s32.totalorder %v151, 0
    %vm226 = vcmp.lt.s32.totalorder %v158, 0
    %vm227 = vcmp.lt.s32.totalorder %v165, 0
    %vm228 = vcmp.lt.s32.totalorder %v172, 0
    %vm229 = vcmp.lt.s32.totalorder %v179, 0
    %vm230 = vcmp.lt.s32.totalorder %v186, 0
    %vm231 = vcmp.lt.s32.totalorder %v193, 0
    %vm232 = vcmp.lt.s32.totalorder %v200, 0
    %vm233 = vmand %vm217, %vm201
    %vm234 = vmand %vm218, %vm202
    %vm235 = vmand %vm219, %vm203
    %vm236 = vmand %vm220, %vm204
    %vm237 = vmand %vm221, %vm205
    %vm238 = vmand %vm222, %vm206
    %vm239 = vmand %vm223, %vm207
    %vm240 = vmand %vm224, %vm208
    %vm241 = vmand %vm225, %vm209
    %vm242 = vmand %vm226, %vm210
    %vm243 = vmand %vm227, %vm211
    %vm244 = vmand %vm228, %vm212
    %vm245 = vmand %vm229, %vm213
    %vm246 = vmand %vm230, %vm214
    %vm247 = vmand %vm231, %vm215
    %vm248 = vmand %vm232, %vm216
    %v249 = vadd.s32 %v95, 16
    %v250 = vadd.s32 %v102, 16
    %v251 = vadd.s32 %v109, 16
    %v252 = vadd.s32 %v116, 16
    %v253 = vadd.s32 %v123, 16
    %v254 = vadd.s32 %v130, 16
    %v255 = vadd.s32 %v137, 16
    %v256 = vadd.s32 %v144, 16
    %v257 = vadd.s32 %v151, 16
    %v258 = vadd.s32 %v158, 16
    %v259 = vadd.s32 %v165, 16
    %v260 = vadd.s32 %v172, 16
    %v261 = vadd.s32 %v179, 16
    %v262 = vadd.s32 %v186, 16
    %v263 = vadd.s32 %v193, 16
    %v264 = vadd.s32 %v200, 16
    %v265 = vsel %vm233, %v249, %v95
    %v266 = vsel %vm234, %v250, %v102
    %v267 = vsel %vm235, %v251, %v109
    %v268 = vsel %vm236, %v252, %v116
    %v269 = vsel %vm237, %v253, %v123
    %v270 = vsel %vm238, %v254, %v130
    %v271 = vsel %vm239, %v255, %v137
    %v272 = vsel %vm240, %v256, %v144
    %v273 = vsel %vm241, %v257, %v151
    %v274 = vsel %vm242, %v258, %v158
    %v275 = vsel %vm243, %v259, %v165
    %v276 = vsel %vm244, %v260, %v172
    %v277 = vsel %vm245, %v261, %v179
    %v278 = vsel %vm246, %v262, %v186
    %v279 = vsel %vm247, %v263, %v193
    %v280 = vsel %vm248, %v264, %v200
    %vm281 = vcmp.ne.s32.totalorder %v265, 0
    %vm282 = vcmp.ne.s32.totalorder %v266, 0
    %vm283 = vcmp.ne.s32.totalorder %v267, 0
    %vm284 = vcmp.ne.s32.totalorder %v268, 0
    %vm285 = vcmp.ne.s32.totalorder %v269, 0
    %vm286 = vcmp.ne.s32.totalorder %v270, 0
    %vm287 = vcmp.ne.s32.totalorder %v271, 0
    %vm288 = vcmp.ne.s32.totalorder %v272, 0
    %vm289 = vcmp.ne.s32.totalorder %v273, 0
    %vm290 = vcmp.ne.s32.totalorder %v274, 0
    %vm291 = vcmp.ne.s32.totalorder %v275, 0
    %vm292 = vcmp.ne.s32.totalorder %v276, 0
    %vm293 = vcmp.ne.s32.totalorder %v277, 0
    %vm294 = vcmp.ne.s32.totalorder %v278, 0
    %vm295 = vcmp.ne.s32.totalorder %v279, 0
    %vm296 = vcmp.ne.s32.totalorder %v280, 0
    %v297 = vsel %vm281, 1, 0
    %v298 = vsel %vm282, 1, 0
    %v299 = vsel %vm283, 1, 0
    %v300 = vsel %vm284, 1, 0
    %v301 = vsel %vm285, 1, 0
    %v302 = vsel %vm286, 1, 0
    %v303 = vsel %vm287, 1, 0
    %v304 = vsel %vm288, 1, 0
    %v305 = vsel %vm289, 1, 0
    %v306 = vsel %vm290, 1, 0
    %v307 = vsel %vm291, 1, 0
    %v308 = vsel %vm292, 1, 0
    %v309 = vsel %vm293, 1, 0
    %v310 = vsel %vm294, 1, 0
    %v311 = vsel %vm295, 1, 0
    %v312 = vsel %vm296, 1, 0
    %v313 = vcvt.s32.f32 %v297
    %v314 = vcvt.s32.f32 %v298
    %v315 = vcvt.s32.f32 %v299
    %v316 = vcvt.s32.f32 %v300
    %v317 = vcvt.s32.f32 %v301
    %v318 = vcvt.s32.f32 %v302
    %v319 = vcvt.s32.f32 %v303
    %v320 = vcvt.s32.f32 %v304
    %v321 = vcvt.s32.f32 %v305
    %v322 = vcvt.s32.f32 %v306
    %v323 = vcvt.s32.f32 %v307
    %v324 = vcvt.s32.f32 %v308
    %v325 = vcvt.s32.f32 %v309
    %v326 = vcvt.s32.f32 %v310
    %v327 = vcvt.s32.f32 %v311
    %v328 = vcvt.s32.f32 %v312
    %vm329 = vcmp.ne.s32.totalorder %v265, 15
    %vm330 = vcmp.ne.s32.totalorder %v266, 15
    %vm331 = vcmp.ne.s32.totalorder %v267, 15
    %vm332 = vcmp.ne.s32.totalorder %v268, 15
    %vm333 = vcmp.ne.s32.totalorder %v269, 15
    %vm334 = vcmp.ne.s32.totalorder %v270, 15
    %vm335 = vcmp.ne.s32.totalorder %v271, 15
    %vm336 = vcmp.ne.s32.totalorder %v272, 15
    %vm337 = vcmp.ne.s32.totalorder %v273, 15
    %vm338 = vcmp.ne.s32.totalorder %v274, 15
    %vm339 = vcmp.ne.s32.totalorder %v275, 15
    %vm340 = vcmp.ne.s32.totalorder %v276, 15
    %vm341 = vcmp.ne.s32.totalorder %v277, 15
    %vm342 = vcmp.ne.s32.totalorder %v278, 15
    %vm343 = vcmp.ne.s32.totalorder %v279, 15
    %vm344 = vcmp.ne.s32.totalorder %v280, 15
    %v345 = vsel %vm329, 1, 0
    %v346 = vsel %vm330, 1, 0
    %v347 = vsel %vm331, 1, 0
    %v348 = vsel %vm332, 1, 0
    %v349 = vsel %vm333, 1, 0
    %v350 = vsel %vm334, 1, 0
    %v351 = vsel %vm335, 1, 0
    %v352 = vsel %vm336, 1, 0
    %v353 = vsel %vm337, 1, 0
    %v354 = vsel %vm338, 1, 0
    %v355 = vsel %vm339, 1, 0
    %v356 = vsel %vm340, 1, 0
    %v357 = vsel %vm341, 1, 0
    %v358 = vsel %vm342, 1, 0
    %v359 = vsel %vm343, 1, 0
    %v360 = vsel %vm344, 1, 0
    %v361 = vcvt.s32.f32 %v345
    %v362 = vcvt.s32.f32 %v346
    %v363 = vcvt.s32.f32 %v347
    %v364 = vcvt.s32.f32 %v348
    %v365 = vcvt.s32.f32 %v349
    %v366 = vcvt.s32.f32 %v350
    %v367 = vcvt.s32.f32 %v351
    %v368 = vcvt.s32.f32 %v352
    %v369 = vcvt.s32.f32 %v353
    %v370 = vcvt.s32.f32 %v354
    %v371 = vcvt.s32.f32 %v355
    %v372 = vcvt.s32.f32 %v356
    %v373 = vcvt.s32.f32 %v357
    %v374 = vcvt.s32.f32 %v358
    %v375 = vcvt.s32.f32 %v359
    %v376 = vcvt.s32.f32 %v360
    %v377 = vld [vmem:[#allocation5] sm:$0xf]
    %v378 = vld [vmem:[#allocation5 + $0x4] sm:$0xf]
    %v379 = vld [vmem:[#allocation5 + $0x8] sm:$0xf]
    %v380 = vld [vmem:[#allocation5 + $0xc] sm:$0xf]
    %v381 = vld [vmem:[#allocation5 + $0x10] sm:$0xf]
    %v382 = vld [vmem:[#allocation5 + $0x14] sm:$0xf]
    %v383 = vld [vmem:[#allocation5 + $0x18] sm:$0xf]
    %v384 = vld [vmem:[#allocation5 + $0x1c] sm:$0xf]
    %v385 = vld [vmem:[#allocation5 + $0x20] sm:$0xf]
    %v386 = vld [vmem:[#allocation5 + $0x24] sm:$0xf]
    %v387 = vld [vmem:[#allocation5 + $0x28] sm:$0xf]
    %v388 = vld [vmem:[#allocation5 + $0x2c] sm:$0xf]
    %v389 = vld [vmem:[#allocation5 + $0x30] sm:$0xf]
    %v390 = vld [vmem:[#allocation5 + $0x34] sm:$0xf]
    %v391 = vld [vmem:[#allocation5 + $0x38] sm:$0xf]
    %v392 = vld [vmem:[#allocation5 + $0x3c] sm:$0xf]
    %v393 = vld [vmem:[#allocation5 + $0x40] sm:$0xf]
    %v394 = vld [vmem:[#allocation5 + $0x44] sm:$0xf]
    %v395 = vld [vmem:[#allocation5 + $0x48] sm:$0xf]
    %v396 = vld [vmem:[#allocation5 + $0x4c] sm:$0xf]
    %v397 = vld [vmem:[#allocation5 + $0x50] sm:$0xf]
    %v398 = vld [vmem:[#allocation5 + $0x54] sm:$0xf]
    %v399 = vld [vmem:[#allocation5 + $0x58] sm:$0xf]
    %v400 = vld [vmem:[#allocation5 + $0x5c] sm:$0xf]
    %v401 = vld [vmem:[#allocation5 + $0x60] sm:$0xf]
    %v402 = vld [vmem:[#allocation5 + $0x64] sm:$0xf]
    %v403 = vld [vmem:[#allocation5 + $0x68] sm:$0xf]
    %v404 = vld [vmem:[#allocation5 + $0x6c] sm:$0xf]
    %v405 = vld [vmem:[#allocation5 + $0x70] sm:$0xf]
    %v406 = vld [vmem:[#allocation5 + $0x74] sm:$0xf]
    %v407 = vld [vmem:[#allocation5 + $0x78] sm:$0xf]
    %v408 = vld [vmem:[#allocation5 + $0x7c] sm:$0xf]
    %v409 = vld [vmem:[#allocation5 + $0x80] sm:$0xf]
    %v410 = vld [vmem:[#allocation5 + $0x84] sm:$0xf]
    %v411 = vld [vmem:[#allocation5 + $0x88] sm:$0xf]
    %v412 = vld [vmem:[#allocation5 + $0x8c] sm:$0xf]
    %v413 = vld [vmem:[#allocation5 + $0x90] sm:$0xf]
    %v414 = vld [vmem:[#allocation5 + $0x94] sm:$0xf]
    %v415 = vld [vmem:[#allocation5 + $0x98] sm:$0xf]
    %v416 = vld [vmem:[#allocation5 + $0x9c] sm:$0xf]
    %v417 = vld [vmem:[#allocation5 + $0xa0] sm:$0xf]
    %v418 = vld [vmem:[#allocation5 + $0xa4] sm:$0xf]
    %v419 = vld [vmem:[#allocation5 + $0xa8] sm:$0xf]
    %v420 = vld [vmem:[#allocation5 + $0xac] sm:$0xf]
    %v421 = vld [vmem:[#allocation5 + $0xb0] sm:$0xf]
    %v422 = vld [vmem:[#allocation5 + $0xb4] sm:$0xf]
    %v423 = vld [vmem:[#allocation5 + $0xb8] sm:$0xf]
    %v424 = vld [vmem:[#allocation5 + $0xbc] sm:$0xf]
    %v425 = vrot.slane %v55, 7
    %v426 = vrot.slane %v56, 7
    %v427 = vrot.slane %v57, 7
    %v428 = vrot.slane %v58, 7
    %v429 = vrot.slane %v59, 7
    %v430 = vrot.slane %v60, 7
    %v431 = vrot.slane %v61, 7
    %v432 = vrot.slane %v62, 7
    %v433 = vrot.slane %v63, 7
    %v434 = vrot.slane %v64, 7
    %v435 = vrot.slane %v65, 7
    %v436 = vrot.slane %v66, 7
    %v437 = vrot.slane %v67, 7
    %v438 = vrot.slane %v68, 7
    %v439 = vrot.slane %v69, 7
    %v440 = vrot.slane %v70, 7
    %vm441 = vcmp.lt.s32.totalorder %v73, 1
    %v442 = vsel %vm441, %v439, %v440
    %v443 = vsel %vm441, %v438, %v439
    %v444 = vsel %vm441, %v437, %v438
    %v445 = vsel %vm441, %v436, %v437
    %v446 = vsel %vm441, %v435, %v436
    %v447 = vsel %vm441, %v434, %v435
    %v448 = vsel %vm441, %v433, %v434
    %v449 = vsel %vm441, %v432, %v433
    %v450 = vsel %vm441, %v431, %v432
    %v451 = vsel %vm441, %v430, %v431
    %v452 = vsel %vm441, %v429, %v430
    %v453 = vsel %vm441, %v428, %v429
    %v454 = vsel %vm441, %v427, %v428
    %v455 = vsel %vm441, %v426, %v427
    %v456 = vsel %vm441, %v425, %v426
    %v457 = vsel %vm441, %v440, %v425
    %v458 = vmul.f32 %v457, %v313
    %v459 = vmul.f32 %v456, %v314
    %v460 = vmul.f32 %v455, %v315
    %v461 = vmul.f32 %v454, %v316
    %v462 = vmul.f32 %v453, %v317
    %v463 = vmul.f32 %v452, %v318
    %v464 = vmul.f32 %v451, %v319
    %v465 = vmul.f32 %v450, %v320
    %v466 = vmul.f32 %v449, %v321
    %v467 = vmul.f32 %v448, %v322
    %v468 = vmul.f32 %v447, %v323
    %v469 = vmul.f32 %v446, %v324
    %v470 = vmul.f32 %v445, %v325
    %v471 = vmul.f32 %v444, %v326
    %v472 = vmul.f32 %v443, %v327
    %v473 = vmul.f32 %v442, %v328
    %v474 = vrot.slane %v55, 1
    %v475 = vrot.slane %v56, 1
    %v476 = vrot.slane %v57, 1
    %v477 = vrot.slane %v58, 1
    %v478 = vrot.slane %v59, 1
    %v479 = vrot.slane %v60, 1
    %v480 = vrot.slane %v61, 1
    %v481 = vrot.slane %v62, 1
    %v482 = vrot.slane %v63, 1
    %v483 = vrot.slane %v64, 1
    %v484 = vrot.slane %v65, 1
    %v485 = vrot.slane %v66, 1
    %v486 = vrot.slane %v67, 1
    %v487 = vrot.slane %v68, 1
    %v488 = vrot.slane %v69, 1
    %v489 = vrot.slane %v70, 1
    %vm490 = vcmp.lt.s32.totalorder %v73, 7
    %v491 = vsel %vm490, %v488, %v489
    %v492 = vsel %vm490, %v487, %v488
    %v493 = vsel %vm490, %v486, %v487
    %v494 = vsel %vm490, %v485, %v486
    %v495 = vsel %vm490, %v484, %v485
    %v496 = vsel %vm490, %v483, %v484
    %v497 = vsel %vm490, %v482, %v483
    %v498 = vsel %vm490, %v481, %v482
    %v499 = vsel %vm490, %v480, %v481
    %v500 = vsel %vm490, %v479, %v480
    %v501 = vsel %vm490, %v478, %v479
    %v502 = vsel %vm490, %v477, %v478
    %v503 = vsel %vm490, %v476, %v477
    %v504 = vsel %vm490, %v475, %v476
    %v505 = vsel %vm490, %v474, %v475
    %v506 = vsel %vm490, %v489, %v474
    %v507 = vmul.f32 %v505, %v361
    %v508 = vmul.f32 %v504, %v362
    %v509 = vmul.f32 %v503, %v363
    %v510 = vmul.f32 %v502, %v364
    %v511 = vmul.f32 %v501, %v365
    %v512 = vmul.f32 %v500, %v366
    %v513 = vmul.f32 %v499, %v367
    %v514 = vmul.f32 %v498, %v368
    %v515 = vmul.f32 %v497, %v369
    %v516 = vmul.f32 %v496, %v370
    %v517 = vmul.f32 %v495, %v371
    %v518 = vmul.f32 %v494, %v372
    %v519 = vmul.f32 %v493, %v373
    %v520 = vmul.f32 %v492, %v374
    %v521 = vmul.f32 %v491, %v375
    %v522 = vmul.f32 %v506, %v376
    %v523 = vpack.c.bf16 %v459, %v458
    %v524 = vpack.c.bf16 %v56, %v55
    %v525 = vpack.c.bf16 %v508, %v507
    %v526 = vpack.c.bf16 %v461, %v460
    %v527 = vpack.c.bf16 %v58, %v57
    %v528 = vpack.c.bf16 %v510, %v509
    %v529 = vpack.c.bf16 %v463, %v462
    %v530 = vpack.c.bf16 %v60, %v59
    %v531 = vpack.c.bf16 %v512, %v511
    %v532 = vpack.c.bf16 %v465, %v464
    %v533 = vpack.c.bf16 %v62, %v61
    %v534 = vpack.c.bf16 %v514, %v513
    %v535 = vpack.c.bf16 %v467, %v466
    %v536 = vpack.c.bf16 %v64, %v63
    %v537 = vpack.c.bf16 %v516, %v515
    %v538 = vpack.c.bf16 %v469, %v468
    %v539 = vpack.c.bf16 %v66, %v65
    %v540 = vpack.c.bf16 %v518, %v517
    %v541 = vpack.c.bf16 %v471, %v470
    %v542 = vpack.c.bf16 %v68, %v67
    %v543 = vpack.c.bf16 %v520, %v519
    %v544 = vpack.c.bf16 %v473, %v472
    %v545 = vpack.c.bf16 %v70, %v69
    %v546 = vpack.c.bf16 %v522, %v521
    %v547 = vlaneseq
    %v548 = vshrl.u32 %v547, 7
    %v549 = vsub.s32 0, %v548
    %v550 = vrot.slane %v71, %v549
    %v599 = vunpack.c.l.b16 %v377
    %v600 = vunpack.c.l.b16 %v378
    %v601 = vunpack.c.l.b16 %v379
    %v602 = vunpack.c.l.b16 %v380
    %v603 = vunpack.c.l.b16 %v381
    %v604 = vunpack.c.l.b16 %v382
    %v605 = vunpack.c.l.b16 %v383
    %v606 = vunpack.c.l.b16 %v384
    %v607 = vunpack.c.l.b16 %v385
    %v608 = vunpack.c.l.b16 %v386
    %v609 = vunpack.c.l.b16 %v387
    %v610 = vunpack.c.l.b16 %v388
    %v611 = vunpack.c.l.b16 %v389
    %v612 = vunpack.c.l.b16 %v390
    %v613 = vunpack.c.l.b16 %v391
    %v614 = vunpack.c.l.b16 %v392
    %v615 = vunpack.c.l.b16 %v393
    %v616 = vunpack.c.l.b16 %v394
    %v617 = vunpack.c.l.b16 %v395
    %v618 = vunpack.c.l.b16 %v396
    %v619 = vunpack.c.l.b16 %v397
    %v620 = vunpack.c.l.b16 %v398
    %v621 = vunpack.c.l.b16 %v399
    %v622 = vunpack.c.l.b16 %v400
    %v623 = vunpack.c.l.b16 %v401
    %v624 = vunpack.c.l.b16 %v402
    %v625 = vunpack.c.l.b16 %v403
    %v626 = vunpack.c.l.b16 %v404
    %v627 = vunpack.c.l.b16 %v405
    %v628 = vunpack.c.l.b16 %v406
    %v629 = vunpack.c.l.b16 %v407
    %v630 = vunpack.c.l.b16 %v408
    %v631 = vunpack.c.l.b16 %v409
    %v632 = vunpack.c.l.b16 %v410
    %v633 = vunpack.c.l.b16 %v411
    %v634 = vunpack.c.l.b16 %v412
    %v635 = vunpack.c.l.b16 %v413
    %v636 = vunpack.c.l.b16 %v414
    %v637 = vunpack.c.l.b16 %v415
    %v638 = vunpack.c.l.b16 %v416
    %v639 = vunpack.c.l.b16 %v417
    %v640 = vunpack.c.l.b16 %v418
    %v641 = vunpack.c.l.b16 %v419
    %v642 = vunpack.c.l.b16 %v420
    %v643 = vunpack.c.l.b16 %v421
    %v644 = vunpack.c.l.b16 %v422
    %v645 = vunpack.c.l.b16 %v423
    %v646 = vunpack.c.l.b16 %v424
    %v647 = vpack.c.b16 %v600, %v599
    %v648 = vpack.c.b16 %v602, %v601
    %v649 = vpack.c.b16 %v604, %v603
    %v650 = vpack.c.b16 %v606, %v605
    %v651 = vpack.c.b16 %v608, %v607
    %v652 = vpack.c.b16 %v610, %v609
    %v653 = vpack.c.b16 %v612, %v611
    %v654 = vpack.c.b16 %v614, %v613
    %v655 = vpack.c.b16 %v616, %v615
    %v656 = vpack.c.b16 %v618, %v617
    %v657 = vpack.c.b16 %v620, %v619
    %v658 = vpack.c.b16 %v622, %v621
    %v659 = vpack.c.b16 %v624, %v623
    %v660 = vpack.c.b16 %v626, %v625
    %v661 = vpack.c.b16 %v628, %v627
    %v662 = vpack.c.b16 %v630, %v629
    %v663 = vpack.c.b16 %v632, %v631
    %v664 = vpack.c.b16 %v634, %v633
    %v665 = vpack.c.b16 %v636, %v635
    %v666 = vpack.c.b16 %v638, %v637
    %v667 = vpack.c.b16 %v640, %v639
    %v668 = vpack.c.b16 %v642, %v641
    %v669 = vpack.c.b16 %v644, %v643
    %v670 = vpack.c.b16 %v646, %v645
    %695 = vmatprep.subr.bf16.mxu0 0
    %696 = vmatpush1.bf16.msra.mxu0 %v654
    %697 = vmatprep.subr.bf16.mxu0 0
    %698 = vmatpush1.bf16.msra.mxu0 %v653
    %699 = vmatprep.subr.bf16.mxu0 0
    %700 = vmatpush1.bf16.msra.mxu0 %v652
    %701 = vmatprep.subr.bf16.mxu0 0
    %702 = vmatpush1.bf16.msra.mxu0 %v651
    %703 = vmatprep.subr.bf16.mxu0 0
    %704 = vmatpush1.bf16.msra.mxu0 %v650
    %705 = vmatprep.subr.bf16.mxu0 0
    %706 = vmatpush1.bf16.msra.mxu0 %v649
    %707 = vmatprep.subr.bf16.mxu0 0
    %708 = vmatpush1.bf16.msra.mxu0 %v648
    %709 = vmatprep.subr.bf16.mxu0 0
    %710 = vmatpush1.bf16.msra.mxu0 %v647
    %711 = vmatprep.subr.bf16.mxu0 0
    %712 = vmatpush2.bf16.msra.mxu0 %v662
    %713 = vmatprep.subr.bf16.mxu0 0
    %714 = vmatpush2.bf16.msra.mxu0 %v661
    %715 = vmatprep.subr.bf16.mxu0 0
    %716 = vmatpush2.bf16.msra.mxu0 %v660
    %717 = vmatprep.subr.bf16.mxu0 0
    %718 = vmatpush2.bf16.msra.mxu0 %v659
    %719 = vmatprep.subr.bf16.mxu0 0
    %720 = vmatpush2.bf16.msra.mxu0 %v658
    %721 = vmatprep.subr.bf16.mxu0 0
    %722 = vmatpush2.bf16.msra.mxu0 %v657
    %723 = vmatprep.subr.bf16.mxu0 0
    %724 = vmatpush2.bf16.msra.mxu0 %v656
    %725 = vmatprep.subr.bf16.mxu0 0
    %726 = vmatpush2.bf16.msra.mxu0 %v655
    %727 = vmatprep.mubr.bf16.mxu0 %v524
    %728 = vmatmul.mubr.bf16.gmra.mxu0 %v523
    %v729 = vpop.f32.mrf.mxu0
    %v730 = vadd.f32 %v550, %v729
    %v731 = vpop.f32.mrf.mxu0
    %v732 = vpop.f32.mrf.mxu0
    %v733 = vadd.f32 %v550, %v732
    %v734 = vpop.f32.mrf.mxu0
    %735 = vmatprep.mubr.bf16.mxu0 %v527
    %736 = vmatmul.mubr.bf16.gmra.mxu0 %v526
    %v737 = vpop.f32.mrf.mxu0
    %v738 = vadd.f32 %v550, %v737
    %v739 = vpop.f32.mrf.mxu0
    %v740 = vpop.f32.mrf.mxu0
    %v741 = vadd.f32 %v550, %v740
    %v742 = vpop.f32.mrf.mxu0
    %743 = vmatprep.mubr.bf16.mxu0 %v530
    %744 = vmatmul.mubr.bf16.gmra.mxu0 %v529
    %v745 = vpop.f32.mrf.mxu0
    %v746 = vadd.f32 %v550, %v745
    %v747 = vpop.f32.mrf.mxu0
    %v748 = vpop.f32.mrf.mxu0
    %v749 = vadd.f32 %v550, %v748
    %v750 = vpop.f32.mrf.mxu0
    %751 = vmatprep.mubr.bf16.mxu0 %v533
    %752 = vmatmul.mubr.bf16.gmra.mxu0 %v532
    %v753 = vpop.f32.mrf.mxu0
    %v754 = vadd.f32 %v550, %v753
    %v755 = vpop.f32.mrf.mxu0
    %v756 = vpop.f32.mrf.mxu0
    %v757 = vadd.f32 %v550, %v756
    %v758 = vpop.f32.mrf.mxu0
    %759 = vmatprep.mubr.bf16.mxu0 %v536
    %760 = vmatmul.mubr.bf16.gmra.mxu0 %v535
    %v761 = vpop.f32.mrf.mxu0
    %v762 = vadd.f32 %v550, %v761
    %v763 = vpop.f32.mrf.mxu0
    %v764 = vpop.f32.mrf.mxu0
    %v765 = vadd.f32 %v550, %v764
    %v766 = vpop.f32.mrf.mxu0
    %767 = vmatprep.mubr.bf16.mxu0 %v539
    %768 = vmatmul.mubr.bf16.gmra.mxu0 %v538
    %v769 = vpop.f32.mrf.mxu0
    %v770 = vadd.f32 %v550, %v769
    %v771 = vpop.f32.mrf.mxu0
    %v772 = vpop.f32.mrf.mxu0
    %v773 = vadd.f32 %v550, %v772
    %v774 = vpop.f32.mrf.mxu0
    %775 = vmatprep.mubr.bf16.mxu0 %v542
    %776 = vmatmul.mubr.bf16.gmra.mxu0 %v541
    %v777 = vpop.f32.mrf.mxu0
    %v778 = vadd.f32 %v550, %v777
    %v779 = vpop.f32.mrf.mxu0
    %v780 = vpop.f32.mrf.mxu0
    %v781 = vadd.f32 %v550, %v780
    %v782 = vpop.f32.mrf.mxu0
    %783 = vmatprep.mubr.bf16.mxu0 %v545
    %784 = vmatmul.mubr.bf16.gmra.mxu0 %v544
    %v785 = vpop.f32.mrf.mxu0
    %v786 = vadd.f32 %v550, %v785
    %v787 = vpop.f32.mrf.mxu0
    %v788 = vpop.f32.mrf.mxu0
    %v789 = vadd.f32 %v550, %v788
    %v790 = vpop.f32.mrf.mxu0
    %791 = vdwg.mxu0
    %792 = vmatprep.subr.bf16.mxu0 0
    %793 = vmatpush1.bf16.msra.mxu0 %v670
    %794 = vmatprep.subr.bf16.mxu0 0
    %795 = vmatpush1.bf16.msra.mxu0 %v669
    %796 = vmatprep.subr.bf16.mxu0 0
    %797 = vmatpush1.bf16.msra.mxu0 %v668
    %798 = vmatprep.subr.bf16.mxu0 0
    %799 = vmatpush1.bf16.msra.mxu0 %v667
    %800 = vmatprep.subr.bf16.mxu0 0
    %801 = vmatpush1.bf16.msra.mxu0 %v666
    %802 = vmatprep.subr.bf16.mxu0 0
    %803 = vmatpush1.bf16.msra.mxu0 %v665
    %804 = vmatprep.subr.bf16.mxu0 0
    %805 = vmatpush1.bf16.msra.mxu0 %v664
    %806 = vmatprep.subr.bf16.mxu0 0
    %807 = vmatpush1.bf16.msra.mxu0 %v663
    %808 = vmatprep.subr.bf16.mxu0 0
    %809 = vmatpush2.bf16.msra.mxu0 0
    %810 = vmatprep.subr.bf16.mxu0 0
    %811 = vmatpush2.bf16.msra.mxu0 0
    %812 = vmatprep.subr.bf16.mxu0 0
    %813 = vmatpush2.bf16.msra.mxu0 0
    %814 = vmatprep.subr.bf16.mxu0 0
    %815 = vmatpush2.bf16.msra.mxu0 0
    %816 = vmatprep.subr.bf16.mxu0 0
    %817 = vmatpush2.bf16.msra.mxu0 0
    %818 = vmatprep.subr.bf16.mxu0 0
    %819 = vmatpush2.bf16.msra.mxu0 0
    %820 = vmatprep.subr.bf16.mxu0 0
    %821 = vmatpush2.bf16.msra.mxu0 0
    %822 = vmatprep.subr.bf16.mxu0 0
    %823 = vmatpush2.bf16.msra.mxu0 0
    %824 = vmatprep.mubr.bf16.mxu0 0
    %825 = vmatmul.mubr.bf16.gmra.mxu0 %v525
    %v826 = vpop.f32.mrf.mxu0
    %v827 = vadd.f32 %v730, %v826
    %v828 = vpop.f32.mrf.mxu0
    %v829 = vpop.f32.mrf.mxu0
    %v830 = vadd.f32 %v733, %v829
    %v831 = vpop.f32.mrf.mxu0
    %832 = vmatprep.mubr.bf16.mxu0 0
    %833 = vmatmul.mubr.bf16.gmra.mxu0 %v528
    %v834 = vpop.f32.mrf.mxu0
    %v835 = vadd.f32 %v738, %v834
    %v836 = vpop.f32.mrf.mxu0
    %v837 = vpop.f32.mrf.mxu0
    %v838 = vadd.f32 %v741, %v837
    %v839 = vpop.f32.mrf.mxu0
    %840 = vmatprep.mubr.bf16.mxu0 0
    %841 = vmatmul.mubr.bf16.gmra.mxu0 %v531
    %v842 = vpop.f32.mrf.mxu0
    %v843 = vadd.f32 %v746, %v842
    %v844 = vpop.f32.mrf.mxu0
    %v845 = vpop.f32.mrf.mxu0
    %v846 = vadd.f32 %v749, %v845
    %v847 = vpop.f32.mrf.mxu0
    %848 = vmatprep.mubr.bf16.mxu0 0
    %849 = vmatmul.mubr.bf16.gmra.mxu0 %v534
    %v850 = vpop.f32.mrf.mxu0
    %v851 = vadd.f32 %v754, %v850
    %v852 = vpop.f32.mrf.mxu0
    %v853 = vpop.f32.mrf.mxu0
    %v854 = vadd.f32 %v757, %v853
    %v855 = vpop.f32.mrf.mxu0
    %856 = vmatprep.mubr.bf16.mxu0 0
    %857 = vmatmul.mubr.bf16.gmra.mxu0 %v537
    %v858 = vpop.f32.mrf.mxu0
    %v859 = vadd.f32 %v762, %v858
    %v860 = vpop.f32.mrf.mxu0
    %v861 = vpop.f32.mrf.mxu0
    %v862 = vadd.f32 %v765, %v861
    %v863 = vpop.f32.mrf.mxu0
    %864 = vmatprep.mubr.bf16.mxu0 0
    %865 = vmatmul.mubr.bf16.gmra.mxu0 %v540
    %v866 = vpop.f32.mrf.mxu0
    %v867 = vadd.f32 %v770, %v866
    %v868 = vpop.f32.mrf.mxu0
    %v869 = vpop.f32.mrf.mxu0
    %v870 = vadd.f32 %v773, %v869
    %v871 = vpop.f32.mrf.mxu0
    %872 = vmatprep.mubr.bf16.mxu0 0
    %873 = vmatmul.mubr.bf16.gmra.mxu0 %v543
    %v874 = vpop.f32.mrf.mxu0
    %v875 = vadd.f32 %v778, %v874
    %v876 = vpop.f32.mrf.mxu0
    %v877 = vpop.f32.mrf.mxu0
    %v878 = vadd.f32 %v781, %v877
    %v879 = vpop.f32.mrf.mxu0
    %880 = vmatprep.mubr.bf16.mxu0 0
    %881 = vmatmul.mubr.bf16.gmra.mxu0 %v546
    %v882 = vpop.f32.mrf.mxu0
    %v883 = vadd.f32 %v786, %v882
    %v884 = vpop.f32.mrf.mxu0
    %v885 = vpop.f32.mrf.mxu0
    %v886 = vadd.f32 %v789, %v885
    %v887 = vpop.f32.mrf.mxu0
    %888 = vdwg.mxu0
    %vm889 = vcmp.ge.f32.partialorder %v827, 0.0
    %vm890 = vcmp.ge.f32.partialorder %v830, 0.0
    %vm891 = vcmp.ge.f32.partialorder %v835, 0.0
    %vm892 = vcmp.ge.f32.partialorder %v838, 0.0
    %vm893 = vcmp.ge.f32.partialorder %v843, 0.0
    %vm894 = vcmp.ge.f32.partialorder %v846, 0.0
    %vm895 = vcmp.ge.f32.partialorder %v851, 0.0
    %vm896 = vcmp.ge.f32.partialorder %v854, 0.0
    %vm897 = vcmp.ge.f32.partialorder %v859, 0.0
    %vm898 = vcmp.ge.f32.partialorder %v862, 0.0
    %vm899 = vcmp.ge.f32.partialorder %v867, 0.0
    %vm900 = vcmp.ge.f32.partialorder %v870, 0.0
    %vm901 = vcmp.ge.f32.partialorder %v875, 0.0
    %vm902 = vcmp.ge.f32.partialorder %v878, 0.0
    %vm903 = vcmp.ge.f32.partialorder %v883, 0.0
    %vm904 = vcmp.ge.f32.partialorder %v886, 0.0
    %v905 = vlaneseq
    %v906 = vshrl.u32 %v905, 7
    %v907 = vsub.s32 2, %v906
    %v908 = vrot.slane %v71, %v907
    %v909 = vmul.f32 %v908, %v827
    %v910 = vmul.f32 %v908, %v830
    %v911 = vmul.f32 %v908, %v835
    %v912 = vmul.f32 %v908, %v838
    %v913 = vmul.f32 %v908, %v843
    %v914 = vmul.f32 %v908, %v846
    %v915 = vmul.f32 %v908, %v851
    %v916 = vmul.f32 %v908, %v854
    %v917 = vmul.f32 %v908, %v859
    %v918 = vmul.f32 %v908, %v862
    %v919 = vmul.f32 %v908, %v867
    %v920 = vmul.f32 %v908, %v870
    %v921 = vmul.f32 %v908, %v875
    %v922 = vmul.f32 %v908, %v878
    %v923 = vmul.f32 %v908, %v883
    %v924 = vmul.f32 %v908, %v886
    %v925 = vsel %vm889, %v827, %v909
    %v926 = vsel %vm890, %v830, %v910
    %v927 = vsel %vm891, %v835, %v911
    %v928 = vsel %vm892, %v838, %v912
    %v929 = vsel %vm893, %v843, %v913
    %v930 = vsel %vm894, %v846, %v914
    %v931 = vsel %vm895, %v851, %v915
    %v932 = vsel %vm896, %v854, %v916
    %v933 = vsel %vm897, %v859, %v917
    %v934 = vsel %vm898, %v862, %v918
    %v935 = vsel %vm899, %v867, %v919
    %v936 = vsel %vm900, %v870, %v920
    %v937 = vsel %vm901, %v875, %v921
    %v938 = vsel %vm902, %v878, %v922
    %v939 = vsel %vm903, %v883, %v923
    %v940 = vsel %vm904, %v886, %v924
    %s941 = scalar_lea.vmem [#allocation5], 192
    %v942 = vld [vmem:[%s941] sm:$0xf]
    %v943 = vld [vmem:[%s941 + $0x4] sm:$0xf]
    %v944 = vld [vmem:[%s941 + $0x8] sm:$0xf]
    %v945 = vld [vmem:[%s941 + $0xc] sm:$0xf]
    %v946 = vld [vmem:[%s941 + $0x10] sm:$0xf]
    %v947 = vld [vmem:[%s941 + $0x14] sm:$0xf]
    %v948 = vld [vmem:[%s941 + $0x18] sm:$0xf]
    %v949 = vld [vmem:[%s941 + $0x1c] sm:$0xf]
    %v950 = vld [vmem:[%s941 + $0x20] sm:$0xf]
    %v951 = vld [vmem:[%s941 + $0x24] sm:$0xf]
    %v952 = vld [vmem:[%s941 + $0x28] sm:$0xf]
    %v953 = vld [vmem:[%s941 + $0x2c] sm:$0xf]
    %v954 = vld [vmem:[%s941 + $0x30] sm:$0xf]
    %v955 = vld [vmem:[%s941 + $0x34] sm:$0xf]
    %v956 = vld [vmem:[%s941 + $0x38] sm:$0xf]
    %v957 = vld [vmem:[%s941 + $0x3c] sm:$0xf]
    %v958 = vld [vmem:[%s941 + $0x40] sm:$0xf]
    %v959 = vld [vmem:[%s941 + $0x44] sm:$0xf]
    %v960 = vld [vmem:[%s941 + $0x48] sm:$0xf]
    %v961 = vld [vmem:[%s941 + $0x4c] sm:$0xf]
    %v962 = vld [vmem:[%s941 + $0x50] sm:$0xf]
    %v963 = vld [vmem:[%s941 + $0x54] sm:$0xf]
    %v964 = vld [vmem:[%s941 + $0x58] sm:$0xf]
    %v965 = vld [vmem:[%s941 + $0x5c] sm:$0xf]
    %v966 = vld [vmem:[%s941 + $0x60] sm:$0xf]
    %v967 = vld [vmem:[%s941 + $0x64] sm:$0xf]
    %v968 = vld [vmem:[%s941 + $0x68] sm:$0xf]
    %v969 = vld [vmem:[%s941 + $0x6c] sm:$0xf]
    %v970 = vld [vmem:[%s941 + $0x70] sm:$0xf]
    %v971 = vld [vmem:[%s941 + $0x74] sm:$0xf]
    %v972 = vld [vmem:[%s941 + $0x78] sm:$0xf]
    %v973 = vld [vmem:[%s941 + $0x7c] sm:$0xf]
    %v974 = vld [vmem:[%s941 + $0x80] sm:$0xf]
    %v975 = vld [vmem:[%s941 + $0x84] sm:$0xf]
    %v976 = vld [vmem:[%s941 + $0x88] sm:$0xf]
    %v977 = vld [vmem:[%s941 + $0x8c] sm:$0xf]
    %v978 = vld [vmem:[%s941 + $0x90] sm:$0xf]
    %v979 = vld [vmem:[%s941 + $0x94] sm:$0xf]
    %v980 = vld [vmem:[%s941 + $0x98] sm:$0xf]
    %v981 = vld [vmem:[%s941 + $0x9c] sm:$0xf]
    %v982 = vld [vmem:[%s941 + $0xa0] sm:$0xf]
    %v983 = vld [vmem:[%s941 + $0xa4] sm:$0xf]
    %v984 = vld [vmem:[%s941 + $0xa8] sm:$0xf]
    %v985 = vld [vmem:[%s941 + $0xac] sm:$0xf]
    %v986 = vld [vmem:[%s941 + $0xb0] sm:$0xf]
    %v987 = vld [vmem:[%s941 + $0xb4] sm:$0xf]
    %v988 = vld [vmem:[%s941 + $0xb8] sm:$0xf]
    %v989 = vld [vmem:[%s941 + $0xbc] sm:$0xf]
    %v990 = vrot.slane %v925, 7
    %v991 = vrot.slane %v926, 7
    %v992 = vrot.slane %v927, 7
    %v993 = vrot.slane %v928, 7
    %v994 = vrot.slane %v929, 7
    %v995 = vrot.slane %v930, 7
    %v996 = vrot.slane %v931, 7
    %v997 = vrot.slane %v932, 7
    %v998 = vrot.slane %v933, 7
    %v999 = vrot.slane %v934, 7
    %v1000 = vrot.slane %v935, 7
    %v1001 = vrot.slane %v936, 7
    %v1002 = vrot.slane %v937, 7
    %v1003 = vrot.slane %v938, 7
    %v1004 = vrot.slane %v939, 7
    %v1005 = vrot.slane %v940, 7
    %v1006 = vsel %vm441, %v1004, %v1005
    %v1007 = vsel %vm441, %v1003, %v1004
    %v1008 = vsel %vm441, %v1002, %v1003
    %v1009 = vsel %vm441, %v1001, %v1002
    %v1010 = vsel %vm441, %v1000, %v1001
    %v1011 = vsel %vm441, %v999, %v1000
    %v1012 = vsel %vm441, %v998, %v999
    %v1013 = vsel %vm441, %v997, %v998
    %v1014 = vsel %vm441, %v996, %v997
    %v1015 = vsel %vm441, %v995, %v996
    %v1016 = vsel %vm441, %v994, %v995
    %v1017 = vsel %vm441, %v993, %v994
    %v1018 = vsel %vm441, %v992, %v993
    %v1019 = vsel %vm441, %v991, %v992
    %v1020 = vsel %vm441, %v990, %v991
    %v1021 = vsel %vm441, %v1005, %v990
    %v1022 = vmul.f32 %v1021, %v313
    %v1023 = vmul.f32 %v1020, %v314
    %v1024 = vmul.f32 %v1019, %v315
    %v1025 = vmul.f32 %v1018, %v316
    %v1026 = vmul.f32 %v1017, %v317
    %v1027 = vmul.f32 %v1016, %v318
    %v1028 = vmul.f32 %v1015, %v319
    %v1029 = vmul.f32 %v1014, %v320
    %v1030 = vmul.f32 %v1013, %v321
    %v1031 = vmul.f32 %v1012, %v322
    %v1032 = vmul.f32 %v1011, %v323
    %v1033 = vmul.f32 %v1010, %v324
    %v1034 = vmul.f32 %v1009, %v325
    %v1035 = vmul.f32 %v1008, %v326
    %v1036 = vmul.f32 %v1007, %v327
    %v1037 = vmul.f32 %v1006, %v328
    %v1038 = vrot.slane %v925, 1
    %v1039 = vrot.slane %v926, 1
    %v1040 = vrot.slane %v927, 1
    %v1041 = vrot.slane %v928, 1
    %v1042 = vrot.slane %v929, 1
    %v1043 = vrot.slane %v930, 1
    %v1044 = vrot.slane %v931, 1
    %v1045 = vrot.slane %v932, 1
    %v1046 = vrot.slane %v933, 1
    %v1047 = vrot.slane %v934, 1
    %v1048 = vrot.slane %v935, 1
    %v1049 = vrot.slane %v936, 1
    %v1050 = vrot.slane %v937, 1
    %v1051 = vrot.slane %v938, 1
    %v1052 = vrot.slane %v939, 1
    %v1053 = vrot.slane %v940, 1
    %v1054 = vsel %vm490, %v1052, %v1053
    %v1055 = vsel %vm490, %v1051, %v1052
    %v1056 = vsel %vm490, %v1050, %v1051
    %v1057 = vsel %vm490, %v1049, %v1050
    %v1058 = vsel %vm490, %v1048, %v1049
    %v1059 = vsel %vm490, %v1047, %v1048
    %v1060 = vsel %vm490, %v1046, %v1047
    %v1061 = vsel %vm490, %v1045, %v1046
    %v1062 = vsel %vm490, %v1044, %v1045
    %v1063 = vsel %vm490, %v1043, %v1044
    %v1064 = vsel %vm490, %v1042, %v1043
    %v1065 = vsel %vm490, %v1041, %v1042
    %v1066 = vsel %vm490, %v1040, %v1041
    %v1067 = vsel %vm490, %v1039, %v1040
    %v1068 = vsel %vm490, %v1038, %v1039
    %v1069 = vsel %vm490, %v1053, %v1038
    %v1070 = vmul.f32 %v1068, %v361
    %v1071 = vmul.f32 %v1067, %v362
    %v1072 = vmul.f32 %v1066, %v363
    %v1073 = vmul.f32 %v1065, %v364
    %v1074 = vmul.f32 %v1064, %v365
    %v1075 = vmul.f32 %v1063, %v366
    %v1076 = vmul.f32 %v1062, %v367
    %v1077 = vmul.f32 %v1061, %v368
    %v1078 = vmul.f32 %v1060, %v369
    %v1079 = vmul.f32 %v1059, %v370
    %v1080 = vmul.f32 %v1058, %v371
    %v1081 = vmul.f32 %v1057, %v372
    %v1082 = vmul.f32 %v1056, %v373
    %v1083 = vmul.f32 %v1055, %v374
    %v1084 = vmul.f32 %v1054, %v375
    %v1085 = vmul.f32 %v1069, %v376
    %v1086 = vpack.c.bf16 %v1023, %v1022
    %v1087 = vpack.c.bf16 %v926, %v925
    %v1088 = vpack.c.bf16 %v1071, %v1070
    %v1089 = vpack.c.bf16 %v1025, %v1024
    %v1090 = vpack.c.bf16 %v928, %v927
    %v1091 = vpack.c.bf16 %v1073, %v1072
    %v1092 = vpack.c.bf16 %v1027, %v1026
    %v1093 = vpack.c.bf16 %v930, %v929
    %v1094 = vpack.c.bf16 %v1075, %v1074
    %v1095 = vpack.c.bf16 %v1029, %v1028
    %v1096 = vpack.c.bf16 %v932, %v931
    %v1097 = vpack.c.bf16 %v1077, %v1076
    %v1098 = vpack.c.bf16 %v1031, %v1030
    %v1099 = vpack.c.bf16 %v934, %v933
    %v1100 = vpack.c.bf16 %v1079, %v1078
    %v1101 = vpack.c.bf16 %v1033, %v1032
    %v1102 = vpack.c.bf16 %v936, %v935
    %v1103 = vpack.c.bf16 %v1081, %v1080
    %v1104 = vpack.c.bf16 %v1035, %v1034
    %v1105 = vpack.c.bf16 %v938, %v937
    %v1106 = vpack.c.bf16 %v1083, %v1082
    %v1107 = vpack.c.bf16 %v1037, %v1036
    %v1108 = vpack.c.bf16 %v940, %v939
    %v1109 = vpack.c.bf16 %v1085, %v1084
    %v1110 = vlaneseq
    %v1111 = vshrl.u32 %v1110, 7
    %v1112 = vsub.s32 1, %v1111
    %v1113 = vrot.slane %v71, %v1112
    %v1162 = vunpack.c.l.b16 %v942
    %v1163 = vunpack.c.l.b16 %v943
    %v1164 = vunpack.c.l.b16 %v944
    %v1165 = vunpack.c.l.b16 %v945
    %v1166 = vunpack.c.l.b16 %v946
    %v1167 = vunpack.c.l.b16 %v947
    %v1168 = vunpack.c.l.b16 %v948
    %v1169 = vunpack.c.l.b16 %v949
    %v1170 = vunpack.c.l.b16 %v950
    %v1171 = vunpack.c.l.b16 %v951
    %v1172 = vunpack.c.l.b16 %v952
    %v1173 = vunpack.c.l.b16 %v953
    %v1174 = vunpack.c.l.b16 %v954
    %v1175 = vunpack.c.l.b16 %v955
    %v1176 = vunpack.c.l.b16 %v956
    %v1177 = vunpack.c.l.b16 %v957
    %v1178 = vunpack.c.l.b16 %v958
    %v1179 = vunpack.c.l.b16 %v959
    %v1180 = vunpack.c.l.b16 %v960
    %v1181 = vunpack.c.l.b16 %v961
    %v1182 = vunpack.c.l.b16 %v962
    %v1183 = vunpack.c.l.b16 %v963
    %v1184 = vunpack.c.l.b16 %v964
    %v1185 = vunpack.c.l.b16 %v965
    %v1186 = vunpack.c.l.b16 %v966
    %v1187 = vunpack.c.l.b16 %v967
    %v1188 = vunpack.c.l.b16 %v968
    %v1189 = vunpack.c.l.b16 %v969
    %v1190 = vunpack.c.l.b16 %v970
    %v1191 = vunpack.c.l.b16 %v971
    %v1192 = vunpack.c.l.b16 %v972
    %v1193 = vunpack.c.l.b16 %v973
    %v1194 = vunpack.c.l.b16 %v974
    %v1195 = vunpack.c.l.b16 %v975
    %v1196 = vunpack.c.l.b16 %v976
    %v1197 = vunpack.c.l.b16 %v977
    %v1198 = vunpack.c.l.b16 %v978
    %v1199 = vunpack.c.l.b16 %v979
    %v1200 = vunpack.c.l.b16 %v980
    %v1201 = vunpack.c.l.b16 %v981
    %v1202 = vunpack.c.l.b16 %v982
    %v1203 = vunpack.c.l.b16 %v983
    %v1204 = vunpack.c.l.b16 %v984
    %v1205 = vunpack.c.l.b16 %v985
    %v1206 = vunpack.c.l.b16 %v986
    %v1207 = vunpack.c.l.b16 %v987
    %v1208 = vunpack.c.l.b16 %v988
    %v1209 = vunpack.c.l.b16 %v989
    %v1210 = vpack.c.b16 %v1163, %v1162
    %v1211 = vpack.c.b16 %v1165, %v1164
    %v1212 = vpack.c.b16 %v1167, %v1166
    %v1213 = vpack.c.b16 %v1169, %v1168
    %v1214 = vpack.c.b16 %v1171, %v1170
    %v1215 = vpack.c.b16 %v1173, %v1172
    %v1216 = vpack.c.b16 %v1175, %v1174
    %v1217 = vpack.c.b16 %v1177, %v1176
    %v1218 = vpack.c.b16 %v1179, %v1178
    %v1219 = vpack.c.b16 %v1181, %v1180
    %v1220 = vpack.c.b16 %v1183, %v1182
    %v1221 = vpack.c.b16 %v1185, %v1184
    %v1222 = vpack.c.b16 %v1187, %v1186
    %v1223 = vpack.c.b16 %v1189, %v1188
    %v1224 = vpack.c.b16 %v1191, %v1190
    %v1225 = vpack.c.b16 %v1193, %v1192
    %v1226 = vpack.c.b16 %v1195, %v1194
    %v1227 = vpack.c.b16 %v1197, %v1196
    %v1228 = vpack.c.b16 %v1199, %v1198
    %v1229 = vpack.c.b16 %v1201, %v1200
    %v1230 = vpack.c.b16 %v1203, %v1202
    %v1231 = vpack.c.b16 %v1205, %v1204
    %v1232 = vpack.c.b16 %v1207, %v1206
    %v1233 = vpack.c.b16 %v1209, %v1208
    %1258 = vmatprep.subr.bf16.mxu0 0
    %1259 = vmatpush1.bf16.msra.mxu0 %v1217
    %1260 = vmatprep.subr.bf16.mxu0 0
    %1261 = vmatpush1.bf16.msra.mxu0 %v1216
    %1262 = vmatprep.subr.bf16.mxu0 0
    %1263 = vmatpush1.bf16.msra.mxu0 %v1215
    %1264 = vmatprep.subr.bf16.mxu0 0
    %1265 = vmatpush1.bf16.msra.mxu0 %v1214
    %1266 = vmatprep.subr.bf16.mxu0 0
    %1267 = vmatpush1.bf16.msra.mxu0 %v1213
    %1268 = vmatprep.subr.bf16.mxu0 0
    %1269 = vmatpush1.bf16.msra.mxu0 %v1212
    %1270 = vmatprep.subr.bf16.mxu0 0
    %1271 = vmatpush1.bf16.msra.mxu0 %v1211
    %1272 = vmatprep.subr.bf16.mxu0 0
    %1273 = vmatpush1.bf16.msra.mxu0 %v1210
    %1274 = vmatprep.subr.bf16.mxu0 0
    %1275 = vmatpush2.bf16.msra.mxu0 %v1225
    %1276 = vmatprep.subr.bf16.mxu0 0
    %1277 = vmatpush2.bf16.msra.mxu0 %v1224
    %1278 = vmatprep.subr.bf16.mxu0 0
    %1279 = vmatpush2.bf16.msra.mxu0 %v1223
    %1280 = vmatprep.subr.bf16.mxu0 0
    %1281 = vmatpush2.bf16.msra.mxu0 %v1222
    %1282 = vmatprep.subr.bf16.mxu0 0
    %1283 = vmatpush2.bf16.msra.mxu0 %v1221
    %1284 = vmatprep.subr.bf16.mxu0 0
    %1285 = vmatpush2.bf16.msra.mxu0 %v1220
    %1286 = vmatprep.subr.bf16.mxu0 0
    %1287 = vmatpush2.bf16.msra.mxu0 %v1219
    %1288 = vmatprep.subr.bf16.mxu0 0
    %1289 = vmatpush2.bf16.msra.mxu0 %v1218
    %1290 = vmatprep.mubr.bf16.mxu0 %v1087
    %1291 = vmatmul.mubr.bf16.gmra.mxu0 %v1086
    %v1292 = vpop.f32.mrf.mxu0
    %v1293 = vadd.f32 %v1113, %v1292
    %v1294 = vpop.f32.mrf.mxu0
    %v1295 = vpop.f32.mrf.mxu0
    %v1296 = vadd.f32 %v1113, %v1295
    %v1297 = vpop.f32.mrf.mxu0
    %1298 = vmatprep.mubr.bf16.mxu0 %v1090
    %1299 = vmatmul.mubr.bf16.gmra.mxu0 %v1089
    %v1300 = vpop.f32.mrf.mxu0
    %v1301 = vadd.f32 %v1113, %v1300
    %v1302 = vpop.f32.mrf.mxu0
    %v1303 = vpop.f32.mrf.mxu0
    %v1304 = vadd.f32 %v1113, %v1303
    %v1305 = vpop.f32.mrf.mxu0
    %1306 = vmatprep.mubr.bf16.mxu0 %v1093
    %1307 = vmatmul.mubr.bf16.gmra.mxu0 %v1092
    %v1308 = vpop.f32.mrf.mxu0
    %v1309 = vadd.f32 %v1113, %v1308
    %v1310 = vpop.f32.mrf.mxu0
    %v1311 = vpop.f32.mrf.mxu0
    %v1312 = vadd.f32 %v1113, %v1311
    %v1313 = vpop.f32.mrf.mxu0
    %1314 = vmatprep.mubr.bf16.mxu0 %v1096
    %1315 = vmatmul.mubr.bf16.gmra.mxu0 %v1095
    %v1316 = vpop.f32.mrf.mxu0
    %v1317 = vadd.f32 %v1113, %v1316
    %v1318 = vpop.f32.mrf.mxu0
    %v1319 = vpop.f32.mrf.mxu0
    %v1320 = vadd.f32 %v1113, %v1319
    %v1321 = vpop.f32.mrf.mxu0
    %1322 = vmatprep.mubr.bf16.mxu0 %v1099
    %1323 = vmatmul.mubr.bf16.gmra.mxu0 %v1098
    %v1324 = vpop.f32.mrf.mxu0
    %v1325 = vadd.f32 %v1113, %v1324
    %v1326 = vpop.f32.mrf.mxu0
    %v1327 = vpop.f32.mrf.mxu0
    %v1328 = vadd.f32 %v1113, %v1327
    %v1329 = vpop.f32.mrf.mxu0
    %1330 = vmatprep.mubr.bf16.mxu0 %v1102
    %1331 = vmatmul.mubr.bf16.gmra.mxu0 %v1101
    %v1332 = vpop.f32.mrf.mxu0
    %v1333 = vadd.f32 %v1113, %v1332
    %v1334 = vpop.f32.mrf.mxu0
    %v1335 = vpop.f32.mrf.mxu0
    %v1336 = vadd.f32 %v1113, %v1335
    %v1337 = vpop.f32.mrf.mxu0
    %1338 = vmatprep.mubr.bf16.mxu0 %v1105
    %1339 = vmatmul.mubr.bf16.gmra.mxu0 %v1104
    %v1340 = vpop.f32.mrf.mxu0
    %v1341 = vadd.f32 %v1113, %v1340
    %v1342 = vpop.f32.mrf.mxu0
    %v1343 = vpop.f32.mrf.mxu0
    %v1344 = vadd.f32 %v1113, %v1343
    %v1345 = vpop.f32.mrf.mxu0
    %1346 = vmatprep.mubr.bf16.mxu0 %v1108
    %1347 = vmatmul.mubr.bf16.gmra.mxu0 %v1107
    %v1348 = vpop.f32.mrf.mxu0
    %v1349 = vadd.f32 %v1113, %v1348
    %v1350 = vpop.f32.mrf.mxu0
    %v1351 = vpop.f32.mrf.mxu0
    %v1352 = vadd.f32 %v1113, %v1351
    %v1353 = vpop.f32.mrf.mxu0
    %1354 = vdwg.mxu0
    %1355 = vmatprep.subr.bf16.mxu0 0
    %1356 = vmatpush1.bf16.msra.mxu0 %v1233
    %1357 = vmatprep.subr.bf16.mxu0 0
    %1358 = vmatpush1.bf16.msra.mxu0 %v1232
    %1359 = vmatprep.subr.bf16.mxu0 0
    %1360 = vmatpush1.bf16.msra.mxu0 %v1231
    %1361 = vmatprep.subr.bf16.mxu0 0
    %1362 = vmatpush1.bf16.msra.mxu0 %v1230
    %1363 = vmatprep.subr.bf16.mxu0 0
    %1364 = vmatpush1.bf16.msra.mxu0 %v1229
    %1365 = vmatprep.subr.bf16.mxu0 0
    %1366 = vmatpush1.bf16.msra.mxu0 %v1228
    %1367 = vmatprep.subr.bf16.mxu0 0
    %1368 = vmatpush1.bf16.msra.mxu0 %v1227
    %1369 = vmatprep.subr.bf16.mxu0 0
    %1370 = vmatpush1.bf16.msra.mxu0 %v1226
    %1371 = vmatprep.subr.bf16.mxu0 0
    %1372 = vmatpush2.bf16.msra.mxu0 0
    %1373 = vmatprep.subr.bf16.mxu0 0
    %1374 = vmatpush2.bf16.msra.mxu0 0
    %1375 = vmatprep.subr.bf16.mxu0 0
    %1376 = vmatpush2.bf16.msra.mxu0 0
    %1377 = vmatprep.subr.bf16.mxu0 0
    %1378 = vmatpush2.bf16.msra.mxu0 0
    %1379 = vmatprep.subr.bf16.mxu0 0
    %1380 = vmatpush2.bf16.msra.mxu0 0
    %1381 = vmatprep.subr.bf16.mxu0 0
    %1382 = vmatpush2.bf16.msra.mxu0 0
    %1383 = vmatprep.subr.bf16.mxu0 0
    %1384 = vmatpush2.bf16.msra.mxu0 0
    %1385 = vmatprep.subr.bf16.mxu0 0
    %1386 = vmatpush2.bf16.msra.mxu0 0
    %1387 = vmatprep.mubr.bf16.mxu0 0
    %1388 = vmatmul.mubr.bf16.gmra.mxu0 %v1088
    %v1389 = vpop.f32.mrf.mxu0
    %v1390 = vadd.f32 %v1293, %v1389
    %v1391 = vpop.f32.mrf.mxu0
    %v1392 = vpop.f32.mrf.mxu0
    %v1393 = vadd.f32 %v1296, %v1392
    %v1394 = vpop.f32.mrf.mxu0
    %1395 = vmatprep.mubr.bf16.mxu0 0
    %1396 = vmatmul.mubr.bf16.gmra.mxu0 %v1091
    %v1397 = vpop.f32.mrf.mxu0
    %v1398 = vadd.f32 %v1301, %v1397
    %v1399 = vpop.f32.mrf.mxu0
    %v1400 = vpop.f32.mrf.mxu0
    %v1401 = vadd.f32 %v1304, %v1400
    %v1402 = vpop.f32.mrf.mxu0
    %1403 = vmatprep.mubr.bf16.mxu0 0
    %1404 = vmatmul.mubr.bf16.gmra.mxu0 %v1094
    %v1405 = vpop.f32.mrf.mxu0
    %v1406 = vadd.f32 %v1309, %v1405
    %v1407 = vpop.f32.mrf.mxu0
    %v1408 = vpop.f32.mrf.mxu0
    %v1409 = vadd.f32 %v1312, %v1408
    %v1410 = vpop.f32.mrf.mxu0
    %1411 = vmatprep.mubr.bf16.mxu0 0
    %1412 = vmatmul.mubr.bf16.gmra.mxu0 %v1097
    %v1413 = vpop.f32.mrf.mxu0
    %v1414 = vadd.f32 %v1317, %v1413
    %v1415 = vpop.f32.mrf.mxu0
    %v1416 = vpop.f32.mrf.mxu0
    %v1417 = vadd.f32 %v1320, %v1416
    %v1418 = vpop.f32.mrf.mxu0
    %1419 = vmatprep.mubr.bf16.mxu0 0
    %1420 = vmatmul.mubr.bf16.gmra.mxu0 %v1100
    %v1421 = vpop.f32.mrf.mxu0
    %v1422 = vadd.f32 %v1325, %v1421
    %v1423 = vpop.f32.mrf.mxu0
    %v1424 = vpop.f32.mrf.mxu0
    %v1425 = vadd.f32 %v1328, %v1424
    %v1426 = vpop.f32.mrf.mxu0
    %1427 = vmatprep.mubr.bf16.mxu0 0
    %1428 = vmatmul.mubr.bf16.gmra.mxu0 %v1103
    %v1429 = vpop.f32.mrf.mxu0
    %v1430 = vadd.f32 %v1333, %v1429
    %v1431 = vpop.f32.mrf.mxu0
    %v1432 = vpop.f32.mrf.mxu0
    %v1433 = vadd.f32 %v1336, %v1432
    %v1434 = vpop.f32.mrf.mxu0
    %1435 = vmatprep.mubr.bf16.mxu0 0
    %1436 = vmatmul.mubr.bf16.gmra.mxu0 %v1106
    %v1437 = vpop.f32.mrf.mxu0
    %v1438 = vadd.f32 %v1341, %v1437
    %v1439 = vpop.f32.mrf.mxu0
    %v1440 = vpop.f32.mrf.mxu0
    %v1441 = vadd.f32 %v1344, %v1440
    %v1442 = vpop.f32.mrf.mxu0
    %1443 = vmatprep.mubr.bf16.mxu0 0
    %1444 = vmatmul.mubr.bf16.gmra.mxu0 %v1109
    %v1445 = vpop.f32.mrf.mxu0
    %v1446 = vadd.f32 %v1349, %v1445
    %v1447 = vpop.f32.mrf.mxu0
    %v1448 = vpop.f32.mrf.mxu0
    %v1449 = vadd.f32 %v1352, %v1448
    %v1450 = vpop.f32.mrf.mxu0
    %1451 = vdwg.mxu0
    %v1452 = vadd.f32 %v55, %v1390
    %v1453 = vadd.f32 %v56, %v1393
    %v1454 = vadd.f32 %v57, %v1398
    %v1455 = vadd.f32 %v58, %v1401
    %v1456 = vadd.f32 %v59, %v1406
    %v1457 = vadd.f32 %v60, %v1409
    %v1458 = vadd.f32 %v61, %v1414
    %v1459 = vadd.f32 %v62, %v1417
    %v1460 = vadd.f32 %v63, %v1422
    %v1461 = vadd.f32 %v64, %v1425
    %v1462 = vadd.f32 %v65, %v1430
    %v1463 = vadd.f32 %v66, %v1433
    %v1464 = vadd.f32 %v67, %v1438
    %v1465 = vadd.f32 %v68, %v1441
    %v1466 = vadd.f32 %v69, %v1446
    %v1467 = vadd.f32 %v70, %v1449
    %1468 = vst [vmem:[#allocation8] sm:$0xff] %v1452
    %1469 = vst [vmem:[#allocation8 + $0x8] sm:$0xff] %v1453
    %1470 = vst [vmem:[#allocation8 + $0x10] sm:$0xff] %v1454
    %1471 = vst [vmem:[#allocation8 + $0x18] sm:$0xff] %v1455
    %1472 = vst [vmem:[#allocation8 + $0x20] sm:$0xff] %v1456
    %1473 = vst [vmem:[#allocation8 + $0x28] sm:$0xff] %v1457
    %1474 = vst [vmem:[#allocation8 + $0x30] sm:$0xff] %v1458
    %1475 = vst [vmem:[#allocation8 + $0x38] sm:$0xff] %v1459
    %1476 = vst [vmem:[#allocation8 + $0x40] sm:$0xff] %v1460
    %1477 = vst [vmem:[#allocation8 + $0x48] sm:$0xff] %v1461
    %1478 = vst [vmem:[#allocation8 + $0x50] sm:$0xff] %v1462
    %1479 = vst [vmem:[#allocation8 + $0x58] sm:$0xff] %v1463
    %1480 = vst [vmem:[#allocation8 + $0x60] sm:$0xff] %v1464
    %1481 = vst [vmem:[#allocation8 + $0x68] sm:$0xff] %v1465
    %1482 = vst [vmem:[#allocation8 + $0x70] sm:$0xff] %v1466
    %1483 = vst [vmem:[#allocation8 + $0x78] sm:$0xff] %v1467
    // Predicated region
    $region26: #{tpu_custom_call.1} parent=1 // pred_check
      _
    $region27: #{tpu_custom_call.1} parent=1 // pred_check_branch
      %1485 = sbr.rel (0) target = $region29
    $region28: #{tpu_custom_call.1} parent=1 // pred_region
      %s1487 = ssub.s32 2048, 2048
      %1488 = vsyncadd [#allocation4], %s1487
      %s1489 = sshll.u32 [#allocation8], 4
      %s1490 = int_to_ptr.vmem [resolvable:$true] %s1489
      %1495 = dma.vmem_to_hbm [thread:$0]  %s1490, 2048, %s3, [#allocation4], 128, 128, 8
    $region29: #{tpu_custom_call.1} parent=1 // pred_fallthru
      _
    // Predicated region
    $region30: #{tpu_custom_call.1} parent=1 // pred_check
      _
    $region31: #{tpu_custom_call.1} parent=1 // pred_check_branch
      %1497 = sbr.rel (0) target = $region33
    $region32: #{tpu_custom_call.1} parent=1 // pred_region
      %1498 = dma.done [#allocation4], 2048
    $region33: #{tpu_custom_call.1} parent=1 // pred_fallthru
      _
    %1499 = vsyncpa [#allocation3], 1
    %1500 = vsyncpa [#allocation6], 1
    %1501 = vsyncpa [#allocation4], 1

</llo_original>
